<compile_context>
chip_gen: v7x
topology: tpu7x:2x2x1
jax: 0.10.0
libtpu: 0.0.40
codegen_flags: <defaults>
</compile_context>

<pallas_src>
import functools

import jax
import jax.numpy as jnp
from jax.experimental import pallas as pl
from jax.experimental.pallas import tpu as pltpu


def _round_up(x, m):
    return ((x + m - 1) // m) * m


def _cdiv(a, b):
    return -(-a // b)


def _tpu_generation():
    """Best-effort TPU generation (4/5/6/7) from the device kind string."""
    try:
        kind = jax.devices()[0].device_kind.lower()
    except Exception:
        return None
    for gen in (7, 6, 5, 4):
        if f"v{gen}" in kind or f"tpu{gen}" in kind:
            return gen
    return None


def _transition_kernel(s_ref, w1_ref, b1_ref, w2_ref, b2_ref, w3_ref, b3_ref,
                       gamma_ref, beta_ref, out_ref, *,
                       num_layers, c_actual, eps, hidden_bf16):
    rows, c_pad = s_ref.shape
    half = rows // 2
    hid_dt = jnp.bfloat16 if hidden_bf16 else jnp.float32

    # Two independent residual streams (f32) -> MXU/VPU interleave.
    sa = s_ref[0:half, :].astype(jnp.float32)
    sb = s_ref[half:rows, :].astype(jnp.float32)

    def layer(s_res, l):
        # dot -> +bias -> ReLU; hidden path in hid_dt, f32 MXU accumulation.
        h = jnp.dot(s_res.astype(jnp.bfloat16), w1_ref[l],
                    preferred_element_type=hid_dt)
        h = jnp.maximum(h + b1_ref[l], 0)
        if not hidden_bf16:
            h = h.astype(jnp.bfloat16)
        h = jnp.dot(h, w2_ref[l], preferred_element_type=hid_dt)
        h = jnp.maximum(h + b2_ref[l], 0)
        if not hidden_bf16:
            h = h.astype(jnp.bfloat16)
        h = jnp.dot(h, w3_ref[l], preferred_element_type=jnp.float32)
        return s_res + (h + b3_ref[l])

    # Static unroll; halves A and B are fully independent, letting the
    # scheduler co-issue one half's matmul with the other half's epilogue.
    for l in range(num_layers):
        sa = layer(sa, l)
        sb = layer(sb, l)

    # Dropout: module evaluated in inference mode -> identity.
    # TODO(synk): training-mode dropout would need pltpu.prng_* masking.

    inv_c = 1.0 / float(c_actual)
    gamma = gamma_ref[...]
    beta = beta_ref[...]

    def layer_norm_store(s, r0):
        if c_actual != c_pad:
            lane = jax.lax.broadcasted_iota(jnp.int32, s.shape, 1)
            mask = lane < c_actual
            s = jnp.where(mask, s, 0.0)      # robust even if pads were nonzero
        mean = jnp.sum(s, axis=-1, keepdims=True) * inv_c
        centered = s - mean
        if c_actual != c_pad:
            centered = jnp.where(mask, centered, 0.0)
        var = jnp.sum(centered * centered, axis=-1, keepdims=True) * inv_c
        out = centered * jax.lax.rsqrt(var + eps) * gamma + beta
        out_ref[r0:r0 + s.shape[0], :] = out.astype(out_ref.dtype)

    layer_norm_store(sa, 0)
    layer_norm_store(sb, half)


def _choose_tiling(n_rows, c_pad, min_tile, gen, vmem_limit_bytes):
    """Pick (row_tile, grid_steps); row_tile is a multiple of min_tile."""
    # Budget: double-buffered in/out row tiles plus the in-kernel f32
    # activation copies -> stay well under half the scoped VMEM limit.
    per_row_bytes = 12 * c_pad * 4
    vmem_rows = max(min_tile, (vmem_limit_bytes // 2) // per_row_bytes)
    hard_cap = 512 if gen == 7 else 1024
    cap = max(min_tile, (min(hard_cap, vmem_rows) // min_tile) * min_tile)

    if gen == 7:
        # Two TensorCores share the "parallel" row axis: use an even number
        # of grid steps (>= 2) so neither core gets 50% more work.
        steps = max(2, _cdiv(n_rows, cap))
        if steps % 2:
            steps += 1
        row_tile = max(min_tile, _round_up(_cdiv(n_rows, steps), min_tile))
        steps = max(2, _cdiv(n_rows, row_tile))
        if steps % 2:
            steps += 1
        return row_tile, steps

    # Single TensorCore (v4/v5e/v6e): one big tile when it fits (no pipeline
    # bubble, maximal MXU M), otherwise the cap.
    row_tile = min(_round_up(n_rows, min_tile), cap)
    return row_tile, _cdiv(n_rows, row_tile)


def structure_module_transition(s, params, *, eps=1e-5, row_tile=None):
    """s: [..., c]. params: dict of stacked layer weights + LayerNorm affine."""
    c = s.shape[-1]
    lead_shape = s.shape[:-1]
    s2d = s.reshape(-1, c)
    n_rows = s2d.shape[0]

    gen = _tpu_generation()
    hidden_bf16 = gen is not None and gen >= 6          # bf16-native VALUs
    if gen in (5, 6):
        vmem_limit = 64 * 1024 * 1024                   # 128 MiB physical
    else:
        vmem_limit = 32 * 1024 * 1024                   # v7x: 64 MiB physical

    # Lane (feature) padding to a multiple of 128: full lanes, unmasked
    # stores, well-filled MXU tiles.
    c_pad = _round_up(c, 128)
    pad_c = c_pad - c

    # Sublane granularity: halves of the row tile must stay (8,128)-aligned
    # (16/32 sublanes minimum for sub-32-bit activations).
    min_tile = {4: 16, 2: 32, 1: 64}.get(jnp.dtype(s.dtype).itemsize, 16)

    if row_tile is None:
        row_tile, grid_steps = _choose_tiling(n_rows, c_pad, min_tile, gen,
                                              vmem_limit)
    else:
        row_tile = max(min_tile, _round_up(row_tile, min_tile))
        grid_steps = _cdiv(n_rows, row_tile)
    n_rows_pad = row_tile * grid_steps
    pad_r = n_rows_pad - n_rows

    # Skip the extra HBM round trip when no padding is actually required.
    if pad_r or pad_c:
        s2d = jnp.pad(s2d, ((0, pad_r), (0, pad_c)))

    def pad_w(w):   # [L, c, c]
        return jnp.pad(w, ((0, 0), (0, pad_c), (0, pad_c))) if pad_c else w

    def pad_b(b):   # [L, 1, c]
        return jnp.pad(b, ((0, 0), (0, 0), (0, pad_c))) if pad_c else b

    def pad_v(v):   # [1, c]
        return jnp.pad(v, ((0, 0), (0, pad_c))) if pad_c else v

    hid_np = jnp.bfloat16 if hidden_bf16 else jnp.float32
    # Weights bf16 (MXU-native operands, half the DMA/VMEM); hidden biases in
    # the hidden dtype; final bias + LayerNorm affine stay f32.
    w1 = pad_w(params["w1"]).astype(jnp.bfloat16)
    w2 = pad_w(params["w2"]).astype(jnp.bfloat16)
    w3 = pad_w(params["w3"]).astype(jnp.bfloat16)
    b1 = pad_b(params["b1"]).astype(hid_np)
    b2 = pad_b(params["b2"]).astype(hid_np)
    b3 = pad_b(params["b3"]).astype(jnp.float32)
    gamma = pad_v(params["gamma"]).astype(jnp.float32)
    beta = pad_v(params["beta"]).astype(jnp.float32)
    num_layers = params["w1"].shape[0]

    kernel = functools.partial(_transition_kernel, num_layers=num_layers,
                               c_actual=c, eps=eps, hidden_bf16=hidden_bf16)

    # Constant index_maps -> parameter blocks DMA'd once, resident in VMEM.
    full3 = lambda shp: pl.BlockSpec(shp, lambda i: (0, 0, 0))
    full2 = lambda shp: pl.BlockSpec(shp, lambda i: (0, 0))

    out = pl.pallas_call(
        kernel,
        out_shape=jax.ShapeDtypeStruct((n_rows_pad, c_pad), s.dtype),
        grid_spec=pltpu.PrefetchScalarGridSpec(
            num_scalar_prefetch=0,
            grid=(grid_steps,),
            in_specs=[
                pl.BlockSpec((row_tile, c_pad), lambda i: (i, 0)),   # s rows
                full3(w1.shape), full3(b1.shape),
                full3(w2.shape), full3(b2.shape),
                full3(w3.shape), full3(b3.shape),
                full2(gamma.shape), full2(beta.shape),
            ],
            out_specs=pl.BlockSpec((row_tile, c_pad), lambda i: (i, 0)),
        ),
        compiler_params=pltpu.CompilerParams(
            dimension_semantics=("parallel",),
            vmem_limit_bytes=vmem_limit),
    )(s2d, w1, b1, w2, b2, w3, b3, gamma, beta)

    if pad_r or pad_c:
        out = out[:n_rows, :c]
    return out.reshape(*lead_shape, c)


def init_params(key, c, num_layers):
    """Deterministic synthetic parameters (shapes match the PyTorch module)."""
    ks = jax.random.split(key, 6)
    scale = 1.0 / jnp.sqrt(jnp.float32(c))
    # Note: the reference 'final' init zeros linear_3; we use small random
    # values instead so the kernel path is numerically non-trivial.
    w1 = jax.random.normal(ks[0], (num_layers, c, c), jnp.float32) * scale
    w2 = jax.random.normal(ks[1], (num_layers, c, c), jnp.float32) * scale
    w3 = jax.random.normal(ks[2], (num_layers, c, c), jnp.float32) * (scale * 0.1)
    b1 = jax.random.normal(ks[3], (num_layers, 1, c), jnp.float32) * 0.01
    b2 = jax.random.normal(ks[4], (num_layers, 1, c), jnp.float32) * 0.01
    b3 = jnp.zeros((num_layers, 1, c), jnp.float32)
    gamma = jnp.ones((1, c), jnp.float32)
    beta = jnp.zeros((1, c), jnp.float32)
    return dict(w1=w1, b1=b1, w2=w2, b2=b2, w3=w3, b3=b3, gamma=gamma, beta=beta)


def _reference(s, params, eps=1e-5, *, mixed=True, hidden_bf16=True):
    """Pure-JAX reference mirroring the PyTorch forward (eval mode).

    mixed=True mirrors the kernel's bf16-operand / f32-accumulated matmuls
    (and, when hidden_bf16, its bf16 bias/ReLU hidden path); mixed=False is
    the exact f32 PyTorch math (loose sanity check).
    """
    num_layers = params["w1"].shape[0]
    s = s.astype(jnp.float32)
    hid = jnp.bfloat16 if (mixed and hidden_bf16) else jnp.float32

    def mm(x, w, out_dt):
        if mixed:
            return jnp.dot(x.astype(jnp.bfloat16), w.astype(jnp.bfloat16),
                           preferred_element_type=out_dt)
        return jnp.dot(x, w, preferred_element_type=jnp.float32)

    for l in range(num_layers):
        s0 = s
        h = jnp.maximum(mm(s, params["w1"][l], hid) + params["b1"][l].astype(hid), 0)
        h = jnp.maximum(mm(h, params["w2"][l], hid) + params["b2"][l].astype(hid), 0)
        h = mm(h, params["w3"][l], jnp.float32) + params["b3"][l]
        s = s0 + h
    mean = jnp.mean(s, axis=-1, keepdims=True)
    var = jnp.mean((s - mean) ** 2, axis=-1, keepdims=True)
    s = (s - mean) * jax.lax.rsqrt(var + eps)
    return s * params["gamma"] + params["beta"]


if __name__ == "__main__":
    key = jax.random.PRNGKey(0)
    k_param, k_input = jax.random.split(key)

    batch, seq, c, num_layers = 2, 8, 32, 2
    params = init_params(k_param, c, num_layers)
    s = jax.random.normal(k_input, (batch, seq, c), jnp.float32)

    out = structure_module_transition(s, params)
    out = jax.block_until_ready(out)

    gen = _tpu_generation()
    hidden_bf16 = gen is not None and gen >= 6
    ref_mixed = _reference(s.reshape(-1, c), params, mixed=True,
                           hidden_bf16=hidden_bf16).reshape(batch, seq, c)
    ref_f32 = _reference(s.reshape(-1, c), params, mixed=False).reshape(batch, seq, c)

    assert out.shape == s.shape and out.dtype == s.dtype
    assert jnp.allclose(out, ref_mixed, atol=1e-2, rtol=1e-2), \
        "mismatch vs mixed-precision reference"
    assert jnp.allclose(out, ref_f32, atol=1e-1, rtol=1e-1), \
        "mismatch vs full-f32 reference (sanity)"

    print("KERNEL_OK")
</pallas_src>

<mosaic_0001>
module attributes {stable_mosaic.version = 11 : i64} {
  func.func @_transition_kernel(%arg0: i32, %arg1: memref<16x128xf32, #tpu.memory_space<vmem>>, %arg2: memref<2x128x128xbf16, #tpu.memory_space<vmem>>, %arg3: memref<2x1x128xf32, #tpu.memory_space<vmem>>, %arg4: memref<2x128x128xbf16, #tpu.memory_space<vmem>>, %arg5: memref<2x1x128xf32, #tpu.memory_space<vmem>>, %arg6: memref<2x128x128xbf16, #tpu.memory_space<vmem>>, %arg7: memref<2x1x128xf32, #tpu.memory_space<vmem>>, %arg8: memref<1x128xf32, #tpu.memory_space<vmem>>, %arg9: memref<1x128xf32, #tpu.memory_space<vmem>>, %arg10: memref<16x128xf32, #tpu.memory_space<vmem>>) attributes {dimension_semantics = [#tpu.dimension_semantics<parallel>], iteration_bounds = array<i64: 1>, scalar_prefetch = 0 : i64, scratch_operands = 0 : i64, tpu.core_type = #tpu.core_type<tc>, window_params = [{transform_indices = @transform_0, window_bounds = array<i64: 16, 128>}, {pipeline_mode = #tpu.pipeline_mode<synchronous>, transform_indices = @transform_1, window_bounds = array<i64: 2, 128, 128>}, {pipeline_mode = #tpu.pipeline_mode<synchronous>, transform_indices = @transform_2, window_bounds = array<i64: 2, 1, 128>}, {pipeline_mode = #tpu.pipeline_mode<synchronous>, transform_indices = @transform_3, window_bounds = array<i64: 2, 128, 128>}, {pipeline_mode = #tpu.pipeline_mode<synchronous>, transform_indices = @transform_4, window_bounds = array<i64: 2, 1, 128>}, {pipeline_mode = #tpu.pipeline_mode<synchronous>, transform_indices = @transform_5, window_bounds = array<i64: 2, 128, 128>}, {pipeline_mode = #tpu.pipeline_mode<synchronous>, transform_indices = @transform_6, window_bounds = array<i64: 2, 1, 128>}, {pipeline_mode = #tpu.pipeline_mode<synchronous>, transform_indices = @transform_7, window_bounds = array<i64: 1, 128>}, {pipeline_mode = #tpu.pipeline_mode<synchronous>, transform_indices = @transform_8, window_bounds = array<i64: 1, 128>}, {transform_indices = @transform_9, window_bounds = array<i64: 16, 128>}]} {
    %c0 = arith.constant 0 : index
    %c0_0 = arith.constant 0 : index
    %0 = vector.load %arg1[%c0, %c0_0] : memref<16x128xf32, #tpu.memory_space<vmem>>, vector<8x128xf32>
    %c8 = arith.constant 8 : index
    %c0_1 = arith.constant 0 : index
    %1 = vector.load %arg1[%c8, %c0_1] : memref<16x128xf32, #tpu.memory_space<vmem>>, vector<8x128xf32>
    %2 = arith.truncf %0 : vector<8x128xf32> to vector<8x128xbf16>
    %c0_2 = arith.constant 0 : index
    %c0_3 = arith.constant 0 : index
    %c0_4 = arith.constant 0 : index
    %3 = vector.load %arg2[%c0_2, %c0_3, %c0_4] : memref<2x128x128xbf16, #tpu.memory_space<vmem>>, vector<1x128x128xbf16>
    %4 = vector.shape_cast %3 : vector<1x128x128xbf16> to vector<128x128xbf16>
    %cst = arith.constant dense<0.000000e+00> : vector<8x128xf32>
    %5 = tpu.matmul %2, %4, %cst {dimension_numbers = #tpu.dot_dimension_numbers<[1], [0], [0], [1], [0, 0, 1, 1], [], []>} : vector<8x128xbf16>, vector<128x128xbf16>, vector<8x128xf32> -> vector<8x128xf32>
    %c0_5 = arith.constant 0 : index
    %c0_6 = arith.constant 0 : index
    %c0_7 = arith.constant 0 : index
    %6 = vector.load %arg3[%c0_5, %c0_6, %c0_7] : memref<2x1x128xf32, #tpu.memory_space<vmem>>, vector<1x1x128xf32>
    %7 = vector.shape_cast %6 : vector<1x1x128xf32> to vector<1x128xf32>
    %8 = vector.broadcast %7 : vector<1x128xf32> to vector<8x128xf32>
    %9 = arith.addf %5, %8 : vector<8x128xf32>
    %cst_8 = arith.constant 0.000000e+00 : f32
    %10 = vector.broadcast %cst_8 : f32 to vector<8x128xf32>
    %11 = arith.maximumf %9, %10 : vector<8x128xf32>
    %12 = arith.truncf %11 : vector<8x128xf32> to vector<8x128xbf16>
    %c0_9 = arith.constant 0 : index
    %c0_10 = arith.constant 0 : index
    %c0_11 = arith.constant 0 : index
    %13 = vector.load %arg4[%c0_9, %c0_10, %c0_11] : memref<2x128x128xbf16, #tpu.memory_space<vmem>>, vector<1x128x128xbf16>
    %14 = vector.shape_cast %13 : vector<1x128x128xbf16> to vector<128x128xbf16>
    %cst_12 = arith.constant dense<0.000000e+00> : vector<8x128xf32>
    %15 = tpu.matmul %12, %14, %cst_12 {dimension_numbers = #tpu.dot_dimension_numbers<[1], [0], [0], [1], [0, 0, 1, 1], [], []>} : vector<8x128xbf16>, vector<128x128xbf16>, vector<8x128xf32> -> vector<8x128xf32>
    %c0_13 = arith.constant 0 : index
    %c0_14 = arith.constant 0 : index
    %c0_15 = arith.constant 0 : index
    %16 = vector.load %arg5[%c0_13, %c0_14, %c0_15] : memref<2x1x128xf32, #tpu.memory_space<vmem>>, vector<1x1x128xf32>
    %17 = vector.shape_cast %16 : vector<1x1x128xf32> to vector<1x128xf32>
    %18 = vector.broadcast %17 : vector<1x128xf32> to vector<8x128xf32>
    %19 = arith.addf %15, %18 : vector<8x128xf32>
    %cst_16 = arith.constant 0.000000e+00 : f32
    %20 = vector.broadcast %cst_16 : f32 to vector<8x128xf32>
    %21 = arith.maximumf %19, %20 : vector<8x128xf32>
    %22 = arith.truncf %21 : vector<8x128xf32> to vector<8x128xbf16>
    %c0_17 = arith.constant 0 : index
    %c0_18 = arith.constant 0 : index
    %c0_19 = arith.constant 0 : index
    %23 = vector.load %arg6[%c0_17, %c0_18, %c0_19] : memref<2x128x128xbf16, #tpu.memory_space<vmem>>, vector<1x128x128xbf16>
    %24 = vector.shape_cast %23 : vector<1x128x128xbf16> to vector<128x128xbf16>
    %cst_20 = arith.constant dense<0.000000e+00> : vector<8x128xf32>
    %25 = tpu.matmul %22, %24, %cst_20 {dimension_numbers = #tpu.dot_dimension_numbers<[1], [0], [0], [1], [0, 0, 1, 1], [], []>} : vector<8x128xbf16>, vector<128x128xbf16>, vector<8x128xf32> -> vector<8x128xf32>
    %c0_21 = arith.constant 0 : index
    %c0_22 = arith.constant 0 : index
    %c0_23 = arith.constant 0 : index
    %26 = vector.load %arg7[%c0_21, %c0_22, %c0_23] : memref<2x1x128xf32, #tpu.memory_space<vmem>>, vector<1x1x128xf32>
    %27 = vector.shape_cast %26 : vector<1x1x128xf32> to vector<1x128xf32>
    %28 = vector.broadcast %27 : vector<1x128xf32> to vector<8x128xf32>
    %29 = arith.addf %25, %28 : vector<8x128xf32>
    %30 = arith.addf %0, %29 : vector<8x128xf32>
    %31 = arith.truncf %1 : vector<8x128xf32> to vector<8x128xbf16>
    %c0_24 = arith.constant 0 : index
    %c0_25 = arith.constant 0 : index
    %c0_26 = arith.constant 0 : index
    %32 = vector.load %arg2[%c0_24, %c0_25, %c0_26] : memref<2x128x128xbf16, #tpu.memory_space<vmem>>, vector<1x128x128xbf16>
    %33 = vector.shape_cast %32 : vector<1x128x128xbf16> to vector<128x128xbf16>
    %cst_27 = arith.constant dense<0.000000e+00> : vector<8x128xf32>
    %34 = tpu.matmul %31, %33, %cst_27 {dimension_numbers = #tpu.dot_dimension_numbers<[1], [0], [0], [1], [0, 0, 1, 1], [], []>} : vector<8x128xbf16>, vector<128x128xbf16>, vector<8x128xf32> -> vector<8x128xf32>
    %c0_28 = arith.constant 0 : index
    %c0_29 = arith.constant 0 : index
    %c0_30 = arith.constant 0 : index
    %35 = vector.load %arg3[%c0_28, %c0_29, %c0_30] : memref<2x1x128xf32, #tpu.memory_space<vmem>>, vector<1x1x128xf32>
    %36 = vector.shape_cast %35 : vector<1x1x128xf32> to vector<1x128xf32>
    %37 = vector.broadcast %36 : vector<1x128xf32> to vector<8x128xf32>
    %38 = arith.addf %34, %37 : vector<8x128xf32>
    %cst_31 = arith.constant 0.000000e+00 : f32
    %39 = vector.broadcast %cst_31 : f32 to vector<8x128xf32>
    %40 = arith.maximumf %38, %39 : vector<8x128xf32>
    %41 = arith.truncf %40 : vector<8x128xf32> to vector<8x128xbf16>
    %c0_32 = arith.constant 0 : index
    %c0_33 = arith.constant 0 : index
    %c0_34 = arith.constant 0 : index
    %42 = vector.load %arg4[%c0_32, %c0_33, %c0_34] : memref<2x128x128xbf16, #tpu.memory_space<vmem>>, vector<1x128x128xbf16>
    %43 = vector.shape_cast %42 : vector<1x128x128xbf16> to vector<128x128xbf16>
    %cst_35 = arith.constant dense<0.000000e+00> : vector<8x128xf32>
    %44 = tpu.matmul %41, %43, %cst_35 {dimension_numbers = #tpu.dot_dimension_numbers<[1], [0], [0], [1], [0, 0, 1, 1], [], []>} : vector<8x128xbf16>, vector<128x128xbf16>, vector<8x128xf32> -> vector<8x128xf32>
    %c0_36 = arith.constant 0 : index
    %c0_37 = arith.constant 0 : index
    %c0_38 = arith.constant 0 : index
    %45 = vector.load %arg5[%c0_36, %c0_37, %c0_38] : memref<2x1x128xf32, #tpu.memory_space<vmem>>, vector<1x1x128xf32>
    %46 = vector.shape_cast %45 : vector<1x1x128xf32> to vector<1x128xf32>
    %47 = vector.broadcast %46 : vector<1x128xf32> to vector<8x128xf32>
    %48 = arith.addf %44, %47 : vector<8x128xf32>
    %cst_39 = arith.constant 0.000000e+00 : f32
    %49 = vector.broadcast %cst_39 : f32 to vector<8x128xf32>
    %50 = arith.maximumf %48, %49 : vector<8x128xf32>
    %51 = arith.truncf %50 : vector<8x128xf32> to vector<8x128xbf16>
    %c0_40 = arith.constant 0 : index
    %c0_41 = arith.constant 0 : index
    %c0_42 = arith.constant 0 : index
    %52 = vector.load %arg6[%c0_40, %c0_41, %c0_42] : memref<2x128x128xbf16, #tpu.memory_space<vmem>>, vector<1x128x128xbf16>
    %53 = vector.shape_cast %52 : vector<1x128x128xbf16> to vector<128x128xbf16>
    %cst_43 = arith.constant dense<0.000000e+00> : vector<8x128xf32>
    %54 = tpu.matmul %51, %53, %cst_43 {dimension_numbers = #tpu.dot_dimension_numbers<[1], [0], [0], [1], [0, 0, 1, 1], [], []>} : vector<8x128xbf16>, vector<128x128xbf16>, vector<8x128xf32> -> vector<8x128xf32>
    %c0_44 = arith.constant 0 : index
    %c0_45 = arith.constant 0 : index
    %c0_46 = arith.constant 0 : index
    %55 = vector.load %arg7[%c0_44, %c0_45, %c0_46] : memref<2x1x128xf32, #tpu.memory_space<vmem>>, vector<1x1x128xf32>
    %56 = vector.shape_cast %55 : vector<1x1x128xf32> to vector<1x128xf32>
    %57 = vector.broadcast %56 : vector<1x128xf32> to vector<8x128xf32>
    %58 = arith.addf %54, %57 : vector<8x128xf32>
    %59 = arith.addf %1, %58 : vector<8x128xf32>
    %60 = arith.truncf %30 : vector<8x128xf32> to vector<8x128xbf16>
    %c1 = arith.constant 1 : index
    %c0_47 = arith.constant 0 : index
    %c0_48 = arith.constant 0 : index
    %61 = vector.load %arg2[%c1, %c0_47, %c0_48] : memref<2x128x128xbf16, #tpu.memory_space<vmem>>, vector<1x128x128xbf16>
    %62 = vector.shape_cast %61 : vector<1x128x128xbf16> to vector<128x128xbf16>
    %cst_49 = arith.constant dense<0.000000e+00> : vector<8x128xf32>
    %63 = tpu.matmul %60, %62, %cst_49 {dimension_numbers = #tpu.dot_dimension_numbers<[1], [0], [0], [1], [0, 0, 1, 1], [], []>} : vector<8x128xbf16>, vector<128x128xbf16>, vector<8x128xf32> -> vector<8x128xf32>
    %c1_50 = arith.constant 1 : index
    %c0_51 = arith.constant 0 : index
    %c0_52 = arith.constant 0 : index
    %64 = vector.load %arg3[%c1_50, %c0_51, %c0_52] : memref<2x1x128xf32, #tpu.memory_space<vmem>>, vector<1x1x128xf32>
    %65 = vector.shape_cast %64 : vector<1x1x128xf32> to vector<1x128xf32>
    %66 = vector.broadcast %65 : vector<1x128xf32> to vector<8x128xf32>
    %67 = arith.addf %63, %66 : vector<8x128xf32>
    %cst_53 = arith.constant 0.000000e+00 : f32
    %68 = vector.broadcast %cst_53 : f32 to vector<8x128xf32>
    %69 = arith.maximumf %67, %68 : vector<8x128xf32>
    %70 = arith.truncf %69 : vector<8x128xf32> to vector<8x128xbf16>
    %c1_54 = arith.constant 1 : index
    %c0_55 = arith.constant 0 : index
    %c0_56 = arith.constant 0 : index
    %71 = vector.load %arg4[%c1_54, %c0_55, %c0_56] : memref<2x128x128xbf16, #tpu.memory_space<vmem>>, vector<1x128x128xbf16>
    %72 = vector.shape_cast %71 : vector<1x128x128xbf16> to vector<128x128xbf16>
    %cst_57 = arith.constant dense<0.000000e+00> : vector<8x128xf32>
    %73 = tpu.matmul %70, %72, %cst_57 {dimension_numbers = #tpu.dot_dimension_numbers<[1], [0], [0], [1], [0, 0, 1, 1], [], []>} : vector<8x128xbf16>, vector<128x128xbf16>, vector<8x128xf32> -> vector<8x128xf32>
    %c1_58 = arith.constant 1 : index
    %c0_59 = arith.constant 0 : index
    %c0_60 = arith.constant 0 : index
    %74 = vector.load %arg5[%c1_58, %c0_59, %c0_60] : memref<2x1x128xf32, #tpu.memory_space<vmem>>, vector<1x1x128xf32>
    %75 = vector.shape_cast %74 : vector<1x1x128xf32> to vector<1x128xf32>
    %76 = vector.broadcast %75 : vector<1x128xf32> to vector<8x128xf32>
    %77 = arith.addf %73, %76 : vector<8x128xf32>
    %cst_61 = arith.constant 0.000000e+00 : f32
    %78 = vector.broadcast %cst_61 : f32 to vector<8x128xf32>
    %79 = arith.maximumf %77, %78 : vector<8x128xf32>
    %80 = arith.truncf %79 : vector<8x128xf32> to vector<8x128xbf16>
    %c1_62 = arith.constant 1 : index
    %c0_63 = arith.constant 0 : index
    %c0_64 = arith.constant 0 : index
    %81 = vector.load %arg6[%c1_62, %c0_63, %c0_64] : memref<2x128x128xbf16, #tpu.memory_space<vmem>>, vector<1x128x128xbf16>
    %82 = vector.shape_cast %81 : vector<1x128x128xbf16> to vector<128x128xbf16>
    %cst_65 = arith.constant dense<0.000000e+00> : vector<8x128xf32>
    %83 = tpu.matmul %80, %82, %cst_65 {dimension_numbers = #tpu.dot_dimension_numbers<[1], [0], [0], [1], [0, 0, 1, 1], [], []>} : vector<8x128xbf16>, vector<128x128xbf16>, vector<8x128xf32> -> vector<8x128xf32>
    %c1_66 = arith.constant 1 : index
    %c0_67 = arith.constant 0 : index
    %c0_68 = arith.constant 0 : index
    %84 = vector.load %arg7[%c1_66, %c0_67, %c0_68] : memref<2x1x128xf32, #tpu.memory_space<vmem>>, vector<1x1x128xf32>
    %85 = vector.shape_cast %84 : vector<1x1x128xf32> to vector<1x128xf32>
    %86 = vector.broadcast %85 : vector<1x128xf32> to vector<8x128xf32>
    %87 = arith.addf %83, %86 : vector<8x128xf32>
    %88 = arith.addf %30, %87 : vector<8x128xf32>
    %89 = arith.truncf %59 : vector<8x128xf32> to vector<8x128xbf16>
    %c1_69 = arith.constant 1 : index
    %c0_70 = arith.constant 0 : index
    %c0_71 = arith.constant 0 : index
    %90 = vector.load %arg2[%c1_69, %c0_70, %c0_71] : memref<2x128x128xbf16, #tpu.memory_space<vmem>>, vector<1x128x128xbf16>
    %91 = vector.shape_cast %90 : vector<1x128x128xbf16> to vector<128x128xbf16>
    %cst_72 = arith.constant dense<0.000000e+00> : vector<8x128xf32>
    %92 = tpu.matmul %89, %91, %cst_72 {dimension_numbers = #tpu.dot_dimension_numbers<[1], [0], [0], [1], [0, 0, 1, 1], [], []>} : vector<8x128xbf16>, vector<128x128xbf16>, vector<8x128xf32> -> vector<8x128xf32>
    %c1_73 = arith.constant 1 : index
    %c0_74 = arith.constant 0 : index
    %c0_75 = arith.constant 0 : index
    %93 = vector.load %arg3[%c1_73, %c0_74, %c0_75] : memref<2x1x128xf32, #tpu.memory_space<vmem>>, vector<1x1x128xf32>
    %94 = vector.shape_cast %93 : vector<1x1x128xf32> to vector<1x128xf32>
    %95 = vector.broadcast %94 : vector<1x128xf32> to vector<8x128xf32>
    %96 = arith.addf %92, %95 : vector<8x128xf32>
    %cst_76 = arith.constant 0.000000e+00 : f32
    %97 = vector.broadcast %cst_76 : f32 to vector<8x128xf32>
    %98 = arith.maximumf %96, %97 : vector<8x128xf32>
    %99 = arith.truncf %98 : vector<8x128xf32> to vector<8x128xbf16>
    %c1_77 = arith.constant 1 : index
    %c0_78 = arith.constant 0 : index
    %c0_79 = arith.constant 0 : index
    %100 = vector.load %arg4[%c1_77, %c0_78, %c0_79] : memref<2x128x128xbf16, #tpu.memory_space<vmem>>, vector<1x128x128xbf16>
    %101 = vector.shape_cast %100 : vector<1x128x128xbf16> to vector<128x128xbf16>
    %cst_80 = arith.constant dense<0.000000e+00> : vector<8x128xf32>
    %102 = tpu.matmul %99, %101, %cst_80 {dimension_numbers = #tpu.dot_dimension_numbers<[1], [0], [0], [1], [0, 0, 1, 1], [], []>} : vector<8x128xbf16>, vector<128x128xbf16>, vector<8x128xf32> -> vector<8x128xf32>
    %c1_81 = arith.constant 1 : index
    %c0_82 = arith.constant 0 : index
    %c0_83 = arith.constant 0 : index
    %103 = vector.load %arg5[%c1_81, %c0_82, %c0_83] : memref<2x1x128xf32, #tpu.memory_space<vmem>>, vector<1x1x128xf32>
    %104 = vector.shape_cast %103 : vector<1x1x128xf32> to vector<1x128xf32>
    %105 = vector.broadcast %104 : vector<1x128xf32> to vector<8x128xf32>
    %106 = arith.addf %102, %105 : vector<8x128xf32>
    %cst_84 = arith.constant 0.000000e+00 : f32
    %107 = vector.broadcast %cst_84 : f32 to vector<8x128xf32>
    %108 = arith.maximumf %106, %107 : vector<8x128xf32>
    %109 = arith.truncf %108 : vector<8x128xf32> to vector<8x128xbf16>
    %c1_85 = arith.constant 1 : index
    %c0_86 = arith.constant 0 : index
    %c0_87 = arith.constant 0 : index
    %110 = vector.load %arg6[%c1_85, %c0_86, %c0_87] : memref<2x128x128xbf16, #tpu.memory_space<vmem>>, vector<1x128x128xbf16>
    %111 = vector.shape_cast %110 : vector<1x128x128xbf16> to vector<128x128xbf16>
    %cst_88 = arith.constant dense<0.000000e+00> : vector<8x128xf32>
    %112 = tpu.matmul %109, %111, %cst_88 {dimension_numbers = #tpu.dot_dimension_numbers<[1], [0], [0], [1], [0, 0, 1, 1], [], []>} : vector<8x128xbf16>, vector<128x128xbf16>, vector<8x128xf32> -> vector<8x128xf32>
    %c1_89 = arith.constant 1 : index
    %c0_90 = arith.constant 0 : index
    %c0_91 = arith.constant 0 : index
    %113 = vector.load %arg7[%c1_89, %c0_90, %c0_91] : memref<2x1x128xf32, #tpu.memory_space<vmem>>, vector<1x1x128xf32>
    %114 = vector.shape_cast %113 : vector<1x1x128xf32> to vector<1x128xf32>
    %115 = vector.broadcast %114 : vector<1x128xf32> to vector<8x128xf32>
    %116 = arith.addf %112, %115 : vector<8x128xf32>
    %117 = arith.addf %59, %116 : vector<8x128xf32>
    %c0_92 = arith.constant 0 : index
    %c0_93 = arith.constant 0 : index
    %118 = vector.load %arg8[%c0_92, %c0_93] : memref<1x128xf32, #tpu.memory_space<vmem>>, vector<1x128xf32>
    %c0_94 = arith.constant 0 : index
    %c0_95 = arith.constant 0 : index
    %119 = vector.load %arg9[%c0_94, %c0_95] : memref<1x128xf32, #tpu.memory_space<vmem>>, vector<1x128xf32>
    %120 = tpu.iota {dimensions = array<i32: 1>} : vector<8x128xi32>
    %c32_i32 = arith.constant 32 : i32
    %121 = vector.broadcast %c32_i32 : i32 to vector<8x128xi32>
    %122 = arith.cmpi slt, %120, %121 : vector<8x128xi32>
    %cst_96 = arith.constant 0.000000e+00 : f32
    %123 = vector.broadcast %cst_96 : f32 to vector<8x128xf32>
    %124 = arith.select %122, %88, %123 : vector<8x128xi1>, vector<8x128xf32>
    %cst_97 = arith.constant dense<0.000000e+00> : vector<8xf32>
    %125 = vector.multi_reduction <add>, %124, %cst_97 [1] : vector<8x128xf32> to vector<8xf32>
    %126 = vector.shape_cast %125 : vector<8xf32> to vector<8x1xf32>
    %cst_98 = arith.constant 3.125000e-02 : f32
    %127 = vector.broadcast %cst_98 : f32 to vector<8x1xf32>
    %128 = arith.mulf %126, %127 : vector<8x1xf32>
    %129 = vector.broadcast %128 : vector<8x1xf32> to vector<8x128xf32>
    %130 = arith.subf %124, %129 : vector<8x128xf32>
    %cst_99 = arith.constant 0.000000e+00 : f32
    %131 = vector.broadcast %cst_99 : f32 to vector<8x128xf32>
    %132 = arith.select %122, %130, %131 : vector<8x128xi1>, vector<8x128xf32>
    %133 = arith.mulf %132, %132 : vector<8x128xf32>
    %cst_100 = arith.constant dense<0.000000e+00> : vector<8xf32>
    %134 = vector.multi_reduction <add>, %133, %cst_100 [1] : vector<8x128xf32> to vector<8xf32>
    %135 = vector.shape_cast %134 : vector<8xf32> to vector<8x1xf32>
    %cst_101 = arith.constant 3.125000e-02 : f32
    %136 = vector.broadcast %cst_101 : f32 to vector<8x1xf32>
    %137 = arith.mulf %135, %136 : vector<8x1xf32>
    %cst_102 = arith.constant 9.99999974E-6 : f32
    %138 = vector.broadcast %cst_102 : f32 to vector<8x1xf32>
    %139 = arith.addf %137, %138 : vector<8x1xf32>
    %140 = math.rsqrt %139 : vector<8x1xf32>
    %141 = vector.broadcast %140 : vector<8x1xf32> to vector<8x128xf32>
    %142 = arith.mulf %132, %141 : vector<8x128xf32>
    %143 = vector.broadcast %118 : vector<1x128xf32> to vector<8x128xf32>
    %144 = arith.mulf %142, %143 : vector<8x128xf32>
    %145 = vector.broadcast %119 : vector<1x128xf32> to vector<8x128xf32>
    %146 = arith.addf %144, %145 : vector<8x128xf32>
    %c0_103 = arith.constant 0 : index
    %c0_104 = arith.constant 0 : index
    %147 = vector.load %arg10[%c0_103, %c0_104] : memref<16x128xf32, #tpu.memory_space<vmem>>, vector<8x128xf32>
    tpu.vector_store %arg10[%c0_103, %c0_104], %146 {strides = array<i32>} : memref<16x128xf32, #tpu.memory_space<vmem>>, vector<8x128xf32>,
    %148 = tpu.iota {dimensions = array<i32: 1>} : vector<8x128xi32>
    %c32_i32_105 = arith.constant 32 : i32
    %149 = vector.broadcast %c32_i32_105 : i32 to vector<8x128xi32>
    %150 = arith.cmpi slt, %148, %149 : vector<8x128xi32>
    %cst_106 = arith.constant 0.000000e+00 : f32
    %151 = vector.broadcast %cst_106 : f32 to vector<8x128xf32>
    %152 = arith.select %150, %117, %151 : vector<8x128xi1>, vector<8x128xf32>
    %cst_107 = arith.constant dense<0.000000e+00> : vector<8xf32>
    %153 = vector.multi_reduction <add>, %152, %cst_107 [1] : vector<8x128xf32> to vector<8xf32>
    %154 = vector.shape_cast %153 : vector<8xf32> to vector<8x1xf32>
    %cst_108 = arith.constant 3.125000e-02 : f32
    %155 = vector.broadcast %cst_108 : f32 to vector<8x1xf32>
    %156 = arith.mulf %154, %155 : vector<8x1xf32>
    %157 = vector.broadcast %156 : vector<8x1xf32> to vector<8x128xf32>
    %158 = arith.subf %152, %157 : vector<8x128xf32>
    %cst_109 = arith.constant 0.000000e+00 : f32
    %159 = vector.broadcast %cst_109 : f32 to vector<8x128xf32>
    %160 = arith.select %150, %158, %159 : vector<8x128xi1>, vector<8x128xf32>
    %161 = arith.mulf %160, %160 : vector<8x128xf32>
    %cst_110 = arith.constant dense<0.000000e+00> : vector<8xf32>
    %162 = vector.multi_reduction <add>, %161, %cst_110 [1] : vector<8x128xf32> to vector<8xf32>
    %163 = vector.shape_cast %162 : vector<8xf32> to vector<8x1xf32>
    %cst_111 = arith.constant 3.125000e-02 : f32
    %164 = vector.broadcast %cst_111 : f32 to vector<8x1xf32>
    %165 = arith.mulf %163, %164 : vector<8x1xf32>
    %cst_112 = arith.constant 9.99999974E-6 : f32
    %166 = vector.broadcast %cst_112 : f32 to vector<8x1xf32>
    %167 = arith.addf %165, %166 : vector<8x1xf32>
    %168 = math.rsqrt %167 : vector<8x1xf32>
    %169 = vector.broadcast %168 : vector<8x1xf32> to vector<8x128xf32>
    %170 = arith.mulf %160, %169 : vector<8x128xf32>
    %171 = vector.broadcast %118 : vector<1x128xf32> to vector<8x128xf32>
    %172 = arith.mulf %170, %171 : vector<8x128xf32>
    %173 = vector.broadcast %119 : vector<1x128xf32> to vector<8x128xf32>
    %174 = arith.addf %172, %173 : vector<8x128xf32>
    %c8_113 = arith.constant 8 : index
    %c0_114 = arith.constant 0 : index
    %175 = vector.load %arg10[%c8_113, %c0_114] : memref<16x128xf32, #tpu.memory_space<vmem>>, vector<8x128xf32>
    tpu.vector_store %arg10[%c8_113, %c0_114], %174 {strides = array<i32>} : memref<16x128xf32, #tpu.memory_space<vmem>>, vector<8x128xf32>,
    return
  }
  func.func @transform_0(%arg0: i32) -> (i32, i32) {
    %c0_i32 = arith.constant 0 : i32
    %c0_i32_0 = arith.constant 0 : i32
    return %arg0, %c0_i32 : i32, i32
  }
  func.func @transform_1(%arg0: i32) -> (i32, i32, i32) {
    %c0_i32 = arith.constant 0 : i32
    %c0_i32_0 = arith.constant 0 : i32
    %c0_i32_1 = arith.constant 0 : i32
    %c0_i32_2 = arith.constant 0 : i32
    return %c0_i32, %c0_i32_0, %c0_i32_1 : i32, i32, i32
  }
  func.func @transform_2(%arg0: i32) -> (i32, i32, i32) {
    %c0_i32 = arith.constant 0 : i32
    %c0_i32_0 = arith.constant 0 : i32
    %c0_i32_1 = arith.constant 0 : i32
    %c0_i32_2 = arith.constant 0 : i32
    return %c0_i32, %c0_i32_0, %c0_i32_1 : i32, i32, i32
  }
  func.func @transform_3(%arg0: i32) -> (i32, i32, i32) {
    %c0_i32 = arith.constant 0 : i32
    %c0_i32_0 = arith.constant 0 : i32
    %c0_i32_1 = arith.constant 0 : i32
    %c0_i32_2 = arith.constant 0 : i32
    return %c0_i32, %c0_i32_0, %c0_i32_1 : i32, i32, i32
  }
  func.func @transform_4(%arg0: i32) -> (i32, i32, i32) {
    %c0_i32 = arith.constant 0 : i32
    %c0_i32_0 = arith.constant 0 : i32
    %c0_i32_1 = arith.constant 0 : i32
    %c0_i32_2 = arith.constant 0 : i32
    return %c0_i32, %c0_i32_0, %c0_i32_1 : i32, i32, i32
  }
  func.func @transform_5(%arg0: i32) -> (i32, i32, i32) {
    %c0_i32 = arith.constant 0 : i32
    %c0_i32_0 = arith.constant 0 : i32
    %c0_i32_1 = arith.constant 0 : i32
    %c0_i32_2 = arith.constant 0 : i32
    return %c0_i32, %c0_i32_0, %c0_i32_1 : i32, i32, i32
  }
  func.func @transform_6(%arg0: i32) -> (i32, i32, i32) {
    %c0_i32 = arith.constant 0 : i32
    %c0_i32_0 = arith.constant 0 : i32
    %c0_i32_1 = arith.constant 0 : i32
    %c0_i32_2 = arith.constant 0 : i32
    return %c0_i32, %c0_i32_0, %c0_i32_1 : i32, i32, i32
  }
  func.func @transform_7(%arg0: i32) -> (i32, i32) {
    %c0_i32 = arith.constant 0 : i32
    %c0_i32_0 = arith.constant 0 : i32
    %c0_i32_1 = arith.constant 0 : i32
    return %c0_i32, %c0_i32_0 : i32, i32
  }
  func.func @transform_8(%arg0: i32) -> (i32, i32) {
    %c0_i32 = arith.constant 0 : i32
    %c0_i32_0 = arith.constant 0 : i32
    %c0_i32_1 = arith.constant 0 : i32
    return %c0_i32, %c0_i32_0 : i32, i32
  }
  func.func @transform_9(%arg0: i32) -> (i32, i32) {
    %c0_i32 = arith.constant 0 : i32
    %c0_i32_0 = arith.constant 0 : i32
    return %arg0, %c0_i32 : i32, i32
  }
}

</mosaic_0001>

<llo_original>
// kernel: tpu_custom_call.1
$region0: #{tpu_custom_call.1}
  #allocation0 [shape = 'u32[]', space=smem, size = 0x4, offset = 0x4, fixed_abs, tag = 'smem constant byte address 0x4 - core index']
  #allocation1 [shape = 'u32[144,128]{1,0:T(1,128)}', space=vmem, size = 0x12000, scoped, tag = 'internal scratch']
  %s0 = inlined_call_operand.hbm [shape: f32[16,128], index: 0, kind: input, shape index: {}]
  %s1 = inlined_call_operand.hbm [shape: bf16[2,128,128], index: 1, kind: input, shape index: {}]
  %s2 = inlined_call_operand.vmem [shape: f32[2,1,128], index: 2, kind: input, shape index: {}]
  %s3 = inlined_call_operand.hbm [shape: bf16[2,128,128], index: 3, kind: input, shape index: {}]
  %s4 = inlined_call_operand.vmem [shape: f32[2,1,128], index: 4, kind: input, shape index: {}]
  %s5 = inlined_call_operand.hbm [shape: bf16[2,128,128], index: 5, kind: input, shape index: {}]
  %s6 = inlined_call_operand.vmem [shape: f32[2,1,128], index: 6, kind: input, shape index: {}]
  %s7 = inlined_call_operand.vmem [shape: f32[1,128], index: 7, kind: input, shape index: {}]
  %s8 = inlined_call_operand.vmem [shape: f32[1,128], index: 8, kind: input, shape index: {}]
  %s9 = inlined_call_operand.hbm [shape: f32[16,128], index: 9, kind: output, shape index: {}]
  %s10 = sld [smem:[#allocation0]]
  $region62: #{tpu_custom_call.1} parent=0
    _
  %s12 = ssub.s32 1, %s10
  %s13 = scalar_select 0, %s12, %s10
  $region1: #{tpu_custom_call.1} parent=0
    #allocation2 [shape = 'u8[8192]{0}', space=vmem, size = 0x2000, scoped, tag = 'input window, operand 0, single buffered']
    #allocation3 [shape = 's32[1]{0}', space=sflag, size = 0x4, scoped, tag = 'scoped memory for tpu_custom_call.1']
    #allocation4 [shape = 's32[1]{0}', space=sflag, size = 0x4, scoped, tag = 'scoped memory for tpu_custom_call.1']
    #allocation5 [shape = 'u8[65536]{0}', space=vmem, size = 0x10000, scoped, tag = 'input window, operand 1, single buffered']
    #allocation6 [shape = 's32[1]{0}', space=sflag, size = 0x4, scoped, tag = 'scoped memory for tpu_custom_call.1']
    #allocation7 [shape = 'u8[65536]{0}', space=vmem, size = 0x10000, scoped, tag = 'input window, operand 3, single buffered']
    #allocation8 [shape = 'u8[65536]{0}', space=vmem, size = 0x10000, scoped, tag = 'input window, operand 5, single buffered']
    #allocation9 [shape = 's32[1]{0}', space=sflag, size = 0x4, scoped, tag = 'scoped memory for tpu_custom_call.1']
    #allocation10 [shape = 'u8[8192]{0}', space=vmem, size = 0x2000, scoped, tag = 'output window, operand 0, single buffered']
    %14 = vsyncpa [#allocation3], 0
    %15 = vsyncpa [#allocation6], 0
    %16 = vsyncpa [#allocation9], 0
    %17 = vsyncpa [#allocation4], 0
    // Predicated region
    $region2: #{tpu_custom_call.1} parent=1 // pred_check
      _
    $region3: #{tpu_custom_call.1} parent=1 // pred_check_branch
      %19 = sbr.rel (0) target = $region5
    $region4: #{tpu_custom_call.1} parent=1 // pred_region
      %s21 = ssub.s32 256, 256
      %22 = vsyncadd [#allocation3], %s21
      %s23 = sshll.u32 [#allocation2], 4
      %s24 = int_to_ptr.vmem [resolvable:$true] %s23
      %29 = dma.hbm_to_vmem [thread:$0]  %s0, 256, %s24, [#allocation3], 128, 128, 8
    $region5: #{tpu_custom_call.1} parent=1 // pred_fallthru
      _
    // Predicated region
    $region6: #{tpu_custom_call.1} parent=1 // pred_check
      _
    $region7: #{tpu_custom_call.1} parent=1 // pred_check_branch
      %31 = sbr.rel (0) target = $region9
    $region8: #{tpu_custom_call.1} parent=1 // pred_region
      %s33 = ssub.s32 2048, 2048
      %34 = vsyncadd [#allocation6], %s33
      %s35 = sshll.u32 [#allocation5], 4
      %s36 = int_to_ptr.vmem [resolvable:$true] %s35
      %41 = dma.hbm_to_vmem [thread:$0]  %s1, 2048, %s36, [#allocation6], 64, 64, 4
    $region9: #{tpu_custom_call.1} parent=1 // pred_fallthru
      _
    // Predicated region
    $region10: #{tpu_custom_call.1} parent=1 // pred_check
      _
    $region11: #{tpu_custom_call.1} parent=1 // pred_check_branch
      %43 = sbr.rel (0) target = $region13
    $region12: #{tpu_custom_call.1} parent=1 // pred_region
      _
    $region13: #{tpu_custom_call.1} parent=1 // pred_fallthru
      _
    // Predicated region
    $region14: #{tpu_custom_call.1} parent=1 // pred_check
      _
    $region15: #{tpu_custom_call.1} parent=1 // pred_check_branch
      %45 = sbr.rel (0) target = $region17
    $region16: #{tpu_custom_call.1} parent=1 // pred_region
      %s47 = ssub.s32 2048, 2048
      %48 = vsyncadd [#allocation6], %s47
      %s49 = sshll.u32 [#allocation7], 4
      %s50 = int_to_ptr.vmem [resolvable:$true] %s49
      %55 = dma.hbm_to_vmem [thread:$0]  %s3, 2048, %s50, [#allocation6], 64, 64, 4
    $region17: #{tpu_custom_call.1} parent=1 // pred_fallthru
      _
    // Predicated region
    $region18: #{tpu_custom_call.1} parent=1 // pred_check
      _
    $region19: #{tpu_custom_call.1} parent=1 // pred_check_branch
      %57 = sbr.rel (0) target = $region21
    $region20: #{tpu_custom_call.1} parent=1 // pred_region
      _
    $region21: #{tpu_custom_call.1} parent=1 // pred_fallthru
      _
    // Predicated region
    $region22: #{tpu_custom_call.1} parent=1 // pred_check
      _
    $region23: #{tpu_custom_call.1} parent=1 // pred_check_branch
      %59 = sbr.rel (0) target = $region25
    $region24: #{tpu_custom_call.1} parent=1 // pred_region
      %s61 = ssub.s32 2048, 2048
      %62 = vsyncadd [#allocation9], %s61
      %s63 = sshll.u32 [#allocation8], 4
      %s64 = int_to_ptr.vmem [resolvable:$true] %s63
      %69 = dma.hbm_to_vmem [thread:$0]  %s5, 2048, %s64, [#allocation9], 64, 64, 4
    $region25: #{tpu_custom_call.1} parent=1 // pred_fallthru
      _
    // Predicated region
    $region26: #{tpu_custom_call.1} parent=1 // pred_check
      _
    $region27: #{tpu_custom_call.1} parent=1 // pred_check_branch
      %71 = sbr.rel (0) target = $region29
    $region28: #{tpu_custom_call.1} parent=1 // pred_region
      _
    $region29: #{tpu_custom_call.1} parent=1 // pred_fallthru
      _
    // Predicated region
    $region30: #{tpu_custom_call.1} parent=1 // pred_check
      _
    $region31: #{tpu_custom_call.1} parent=1 // pred_check_branch
      %73 = sbr.rel (0) target = $region33
    $region32: #{tpu_custom_call.1} parent=1 // pred_region
      _
    $region33: #{tpu_custom_call.1} parent=1 // pred_fallthru
      _
    // Predicated region
    $region34: #{tpu_custom_call.1} parent=1 // pred_check
      _
    $region35: #{tpu_custom_call.1} parent=1 // pred_check_branch
      %75 = sbr.rel (0) target = $region37
    $region36: #{tpu_custom_call.1} parent=1 // pred_region
      _
    $region37: #{tpu_custom_call.1} parent=1 // pred_fallthru
      _
    // Predicated region
    $region38: #{tpu_custom_call.1} parent=1 // pred_check
      _
    $region39: #{tpu_custom_call.1} parent=1 // pred_check_branch
      %77 = sbr.rel (0) target = $region41
    $region40: #{tpu_custom_call.1} parent=1 // pred_region
      %78 = dma.done [#allocation3], 256
    $region41: #{tpu_custom_call.1} parent=1 // pred_fallthru
      _
    // Predicated region
    $region42: #{tpu_custom_call.1} parent=1 // pred_check
      _
    $region43: #{tpu_custom_call.1} parent=1 // pred_check_branch
      %80 = sbr.rel (0) target = $region45
    $region44: #{tpu_custom_call.1} parent=1 // pred_region
      %81 = dma.done [#allocation6], 2048
    $region45: #{tpu_custom_call.1} parent=1 // pred_fallthru
      _
    // Predicated region
    $region46: #{tpu_custom_call.1} parent=1 // pred_check
      _
    $region47: #{tpu_custom_call.1} parent=1 // pred_check_branch
      %83 = sbr.rel (0) target = $region49
    $region48: #{tpu_custom_call.1} parent=1 // pred_region
      %84 = dma.done [#allocation6], 2048
    $region49: #{tpu_custom_call.1} parent=1 // pred_fallthru
      _
    // Predicated region
    $region50: #{tpu_custom_call.1} parent=1 // pred_check
      _
    $region51: #{tpu_custom_call.1} parent=1 // pred_check_branch
      %86 = sbr.rel (0) target = $region53
    $region52: #{tpu_custom_call.1} parent=1 // pred_region
      %87 = dma.done [#allocation9], 2048
    $region53: #{tpu_custom_call.1} parent=1 // pred_fallthru
      _
    %v89 = vld [vmem:[#allocation2] sm:$0xff]
    %v90 = vld [vmem:[#allocation2 + $0x8] sm:$0xff]
    %v91 = vpack.c.bf16 %v89, %v89
    %v92 = vld [vmem:[#allocation5] sm:$0xf]
    %v93 = vld [vmem:[#allocation5 + $0x4] sm:$0xf]
    %v94 = vld [vmem:[#allocation5 + $0x8] sm:$0xf]
    %v95 = vld [vmem:[#allocation5 + $0xc] sm:$0xf]
    %v96 = vld [vmem:[#allocation5 + $0x10] sm:$0xf]
    %v97 = vld [vmem:[#allocation5 + $0x14] sm:$0xf]
    %v98 = vld [vmem:[#allocation5 + $0x18] sm:$0xf]
    %v99 = vld [vmem:[#allocation5 + $0x1c] sm:$0xf]
    %v100 = vld [vmem:[#allocation5 + $0x20] sm:$0xf]
    %v101 = vld [vmem:[#allocation5 + $0x24] sm:$0xf]
    %v102 = vld [vmem:[#allocation5 + $0x28] sm:$0xf]
    %v103 = vld [vmem:[#allocation5 + $0x2c] sm:$0xf]
    %v104 = vld [vmem:[#allocation5 + $0x30] sm:$0xf]
    %v105 = vld [vmem:[#allocation5 + $0x34] sm:$0xf]
    %v106 = vld [vmem:[#allocation5 + $0x38] sm:$0xf]
    %v107 = vld [vmem:[#allocation5 + $0x3c] sm:$0xf]
    %v108 = vld [vmem:[%s2] sm:$0x1]
    %v110 = vlaneseq
    %v111 = vshrl.u32 %v110, 7
    %v112 = vsub.s32 0, %v111
    %v113 = vrot.slane %v108, %v112
    %v131 = vunpack.c.l.b16 %v92
    %v132 = vunpack.c.l.b16 %v93
    %v133 = vunpack.c.l.b16 %v94
    %v134 = vunpack.c.l.b16 %v95
    %v135 = vunpack.c.l.b16 %v96
    %v136 = vunpack.c.l.b16 %v97
    %v137 = vunpack.c.l.b16 %v98
    %v138 = vunpack.c.l.b16 %v99
    %v139 = vunpack.c.l.b16 %v100
    %v140 = vunpack.c.l.b16 %v101
    %v141 = vunpack.c.l.b16 %v102
    %v142 = vunpack.c.l.b16 %v103
    %v143 = vunpack.c.l.b16 %v104
    %v144 = vunpack.c.l.b16 %v105
    %v145 = vunpack.c.l.b16 %v106
    %v146 = vunpack.c.l.b16 %v107
    %v147 = vpack.c.b16 %v132, %v131
    %v148 = vpack.c.b16 %v134, %v133
    %v149 = vpack.c.b16 %v136, %v135
    %v150 = vpack.c.b16 %v138, %v137
    %v151 = vpack.c.b16 %v140, %v139
    %v152 = vpack.c.b16 %v142, %v141
    %v153 = vpack.c.b16 %v144, %v143
    %v154 = vpack.c.b16 %v146, %v145
    %163 = vmatprep.subr.bf16.mxu0 0
    %164 = vmatpush1.bf16.msra.mxu0 %v147
    %165 = vmatprep.subr.bf16.mxu0 0
    %166 = vmatpush1.bf16.msra.mxu0 %v148
    %167 = vmatprep.subr.bf16.mxu0 0
    %168 = vmatpush1.bf16.msra.mxu0 %v149
    %169 = vmatprep.subr.bf16.mxu0 0
    %170 = vmatpush1.bf16.msra.mxu0 %v150
    %171 = vmatprep.subr.bf16.mxu0 0
    %172 = vmatpush1.bf16.msra.mxu0 %v151
    %173 = vmatprep.subr.bf16.mxu0 0
    %174 = vmatpush1.bf16.msra.mxu0 %v152
    %175 = vmatprep.subr.bf16.mxu0 0
    %176 = vmatpush1.bf16.msra.mxu0 %v153
    %177 = vmatprep.subr.bf16.mxu0 0
    %178 = vmatpush1.bf16.msra.mxu0 %v154
    %179 = vmatprep.subr.bf16.mxu0 0
    %180 = vmatpush1.bf16.msra.mxu0 0
    %181 = vmatprep.subr.bf16.mxu0 0
    %182 = vmatpush1.bf16.msra.mxu0 0
    %183 = vmatprep.subr.bf16.mxu0 0
    %184 = vmatpush1.bf16.msra.mxu0 0
    %185 = vmatprep.subr.bf16.mxu0 0
    %186 = vmatpush1.bf16.msra.mxu0 0
    %187 = vmatprep.subr.bf16.mxu0 0
    %188 = vmatpush1.bf16.msra.mxu0 0
    %189 = vmatprep.subr.bf16.mxu0 0
    %190 = vmatpush1.bf16.msra.mxu0 0
    %191 = vmatprep.subr.bf16.mxu0 0
    %192 = vmatpush1.bf16.msra.mxu0 0
    %193 = vmatprep.subr.bf16.mxu0 0
    %194 = vmatpush1.bf16.msra.mxu0 0
    %195 = vmatprep.mubr.bf16.mxu0 0
    %196 = vmatmul.mubr.bf16.gmra.mrb[0].mxu0 %v91
    %v197 = vpop.f32.mrb[0].mxu0
    %v198 = vadd.f32 %v113, %v197
    %v199 = vpop.f32.mrb[0].mxu0
    %v200 = vpop.f32.mrb[0].mxu0
    %v201 = vpop.f32.mrb[0].mxu0
    %202 = vdwg.mxu0
    %v203 = vmax.f32 %v198, 0.0
    %v204 = vpack.c.bf16 %v203, %v203
    %v205 = vld [vmem:[#allocation7] sm:$0xf]
    %v206 = vld [vmem:[#allocation7 + $0x4] sm:$0xf]
    %v207 = vld [vmem:[#allocation7 + $0x8] sm:$0xf]
    %v208 = vld [vmem:[#allocation7 + $0xc] sm:$0xf]
    %v209 = vld [vmem:[#allocation7 + $0x10] sm:$0xf]
    %v210 = vld [vmem:[#allocation7 + $0x14] sm:$0xf]
    %v211 = vld [vmem:[#allocation7 + $0x18] sm:$0xf]
    %v212 = vld [vmem:[#allocation7 + $0x1c] sm:$0xf]
    %v213 = vld [vmem:[#allocation7 + $0x20] sm:$0xf]
    %v214 = vld [vmem:[#allocation7 + $0x24] sm:$0xf]
    %v215 = vld [vmem:[#allocation7 + $0x28] sm:$0xf]
    %v216 = vld [vmem:[#allocation7 + $0x2c] sm:$0xf]
    %v217 = vld [vmem:[#allocation7 + $0x30] sm:$0xf]
    %v218 = vld [vmem:[#allocation7 + $0x34] sm:$0xf]
    %v219 = vld [vmem:[#allocation7 + $0x38] sm:$0xf]
    %v220 = vld [vmem:[#allocation7 + $0x3c] sm:$0xf]
    %v221 = vld [vmem:[%s4] sm:$0x1]
    %v223 = vlaneseq
    %v224 = vshrl.u32 %v223, 7
    %v225 = vsub.s32 0, %v224
    %v226 = vrot.slane %v221, %v225
    %v244 = vunpack.c.l.b16 %v205
    %v245 = vunpack.c.l.b16 %v206
    %v246 = vunpack.c.l.b16 %v207
    %v247 = vunpack.c.l.b16 %v208
    %v248 = vunpack.c.l.b16 %v209
    %v249 = vunpack.c.l.b16 %v210
    %v250 = vunpack.c.l.b16 %v211
    %v251 = vunpack.c.l.b16 %v212
    %v252 = vunpack.c.l.b16 %v213
    %v253 = vunpack.c.l.b16 %v214
    %v254 = vunpack.c.l.b16 %v215
    %v255 = vunpack.c.l.b16 %v216
    %v256 = vunpack.c.l.b16 %v217
    %v257 = vunpack.c.l.b16 %v218
    %v258 = vunpack.c.l.b16 %v219
    %v259 = vunpack.c.l.b16 %v220
    %v260 = vpack.c.b16 %v245, %v244
    %v261 = vpack.c.b16 %v247, %v246
    %v262 = vpack.c.b16 %v249, %v248
    %v263 = vpack.c.b16 %v251, %v250
    %v264 = vpack.c.b16 %v253, %v252
    %v265 = vpack.c.b16 %v255, %v254
    %v266 = vpack.c.b16 %v257, %v256
    %v267 = vpack.c.b16 %v259, %v258
    %276 = vmatprep.subr.bf16.mxu0 0
    %277 = vmatpush1.bf16.msra.mxu0 %v260
    %278 = vmatprep.subr.bf16.mxu0 0
    %279 = vmatpush1.bf16.msra.mxu0 %v261
    %280 = vmatprep.subr.bf16.mxu0 0
    %281 = vmatpush1.bf16.msra.mxu0 %v262
    %282 = vmatprep.subr.bf16.mxu0 0
    %283 = vmatpush1.bf16.msra.mxu0 %v263
    %284 = vmatprep.subr.bf16.mxu0 0
    %285 = vmatpush1.bf16.msra.mxu0 %v264
    %286 = vmatprep.subr.bf16.mxu0 0
    %287 = vmatpush1.bf16.msra.mxu0 %v265
    %288 = vmatprep.subr.bf16.mxu0 0
    %289 = vmatpush1.bf16.msra.mxu0 %v266
    %290 = vmatprep.subr.bf16.mxu0 0
    %291 = vmatpush1.bf16.msra.mxu0 %v267
    %292 = vmatprep.subr.bf16.mxu0 0
    %293 = vmatpush1.bf16.msra.mxu0 0
    %294 = vmatprep.subr.bf16.mxu0 0
    %295 = vmatpush1.bf16.msra.mxu0 0
    %296 = vmatprep.subr.bf16.mxu0 0
    %297 = vmatpush1.bf16.msra.mxu0 0
    %298 = vmatprep.subr.bf16.mxu0 0
    %299 = vmatpush1.bf16.msra.mxu0 0
    %300 = vmatprep.subr.bf16.mxu0 0
    %301 = vmatpush1.bf16.msra.mxu0 0
    %302 = vmatprep.subr.bf16.mxu0 0
    %303 = vmatpush1.bf16.msra.mxu0 0
    %304 = vmatprep.subr.bf16.mxu0 0
    %305 = vmatpush1.bf16.msra.mxu0 0
    %306 = vmatprep.subr.bf16.mxu0 0
    %307 = vmatpush1.bf16.msra.mxu0 0
    %308 = vmatprep.mubr.bf16.mxu0 0
    %309 = vmatmul.mubr.bf16.gmra.mrb[0].mxu0 %v204
    %v310 = vpop.f32.mrb[0].mxu0
    %v311 = vadd.f32 %v226, %v310
    %v312 = vpop.f32.mrb[0].mxu0
    %v313 = vpop.f32.mrb[0].mxu0
    %v314 = vpop.f32.mrb[0].mxu0
    %315 = vdwg.mxu0
    %v316 = vmax.f32 %v311, 0.0
    %v317 = vpack.c.bf16 %v316, %v316
    %v318 = vld [vmem:[#allocation8] sm:$0xf]
    %v319 = vld [vmem:[#allocation8 + $0x4] sm:$0xf]
    %v320 = vld [vmem:[#allocation8 + $0x8] sm:$0xf]
    %v321 = vld [vmem:[#allocation8 + $0xc] sm:$0xf]
    %v322 = vld [vmem:[#allocation8 + $0x10] sm:$0xf]
    %v323 = vld [vmem:[#allocation8 + $0x14] sm:$0xf]
    %v324 = vld [vmem:[#allocation8 + $0x18] sm:$0xf]
    %v325 = vld [vmem:[#allocation8 + $0x1c] sm:$0xf]
    %v326 = vld [vmem:[#allocation8 + $0x20] sm:$0xf]
    %v327 = vld [vmem:[#allocation8 + $0x24] sm:$0xf]
    %v328 = vld [vmem:[#allocation8 + $0x28] sm:$0xf]
    %v329 = vld [vmem:[#allocation8 + $0x2c] sm:$0xf]
    %v330 = vld [vmem:[#allocation8 + $0x30] sm:$0xf]
    %v331 = vld [vmem:[#allocation8 + $0x34] sm:$0xf]
    %v332 = vld [vmem:[#allocation8 + $0x38] sm:$0xf]
    %v333 = vld [vmem:[#allocation8 + $0x3c] sm:$0xf]
    %v334 = vld [vmem:[%s6] sm:$0x1]
    %v336 = vlaneseq
    %v337 = vshrl.u32 %v336, 7
    %v338 = vsub.s32 0, %v337
    %v339 = vrot.slane %v334, %v338
    %v357 = vunpack.c.l.b16 %v318
    %v358 = vunpack.c.l.b16 %v319
    %v359 = vunpack.c.l.b16 %v320
    %v360 = vunpack.c.l.b16 %v321
    %v361 = vunpack.c.l.b16 %v322
    %v362 = vunpack.c.l.b16 %v323
    %v363 = vunpack.c.l.b16 %v324
    %v364 = vunpack.c.l.b16 %v325
    %v365 = vunpack.c.l.b16 %v326
    %v366 = vunpack.c.l.b16 %v327
    %v367 = vunpack.c.l.b16 %v328
    %v368 = vunpack.c.l.b16 %v329
    %v369 = vunpack.c.l.b16 %v330
    %v370 = vunpack.c.l.b16 %v331
    %v371 = vunpack.c.l.b16 %v332
    %v372 = vunpack.c.l.b16 %v333
    %v373 = vpack.c.b16 %v358, %v357
    %v374 = vpack.c.b16 %v360, %v359
    %v375 = vpack.c.b16 %v362, %v361
    %v376 = vpack.c.b16 %v364, %v363
    %v377 = vpack.c.b16 %v366, %v365
    %v378 = vpack.c.b16 %v368, %v367
    %v379 = vpack.c.b16 %v370, %v369
    %v380 = vpack.c.b16 %v372, %v371
    %389 = vmatprep.subr.bf16.mxu0 0
    %390 = vmatpush1.bf16.msra.mxu0 %v373
    %391 = vmatprep.subr.bf16.mxu0 0
    %392 = vmatpush1.bf16.msra.mxu0 %v374
    %393 = vmatprep.subr.bf16.mxu0 0
    %394 = vmatpush1.bf16.msra.mxu0 %v375
    %395 = vmatprep.subr.bf16.mxu0 0
    %396 = vmatpush1.bf16.msra.mxu0 %v376
    %397 = vmatprep.subr.bf16.mxu0 0
    %398 = vmatpush1.bf16.msra.mxu0 %v377
    %399 = vmatprep.subr.bf16.mxu0 0
    %400 = vmatpush1.bf16.msra.mxu0 %v378
    %401 = vmatprep.subr.bf16.mxu0 0
    %402 = vmatpush1.bf16.msra.mxu0 %v379
    %403 = vmatprep.subr.bf16.mxu0 0
    %404 = vmatpush1.bf16.msra.mxu0 %v380
    %405 = vmatprep.subr.bf16.mxu0 0
    %406 = vmatpush1.bf16.msra.mxu0 0
    %407 = vmatprep.subr.bf16.mxu0 0
    %408 = vmatpush1.bf16.msra.mxu0 0
    %409 = vmatprep.subr.bf16.mxu0 0
    %410 = vmatpush1.bf16.msra.mxu0 0
    %411 = vmatprep.subr.bf16.mxu0 0
    %412 = vmatpush1.bf16.msra.mxu0 0
    %413 = vmatprep.subr.bf16.mxu0 0
    %414 = vmatpush1.bf16.msra.mxu0 0
    %415 = vmatprep.subr.bf16.mxu0 0
    %416 = vmatpush1.bf16.msra.mxu0 0
    %417 = vmatprep.subr.bf16.mxu0 0
    %418 = vmatpush1.bf16.msra.mxu0 0
    %419 = vmatprep.subr.bf16.mxu0 0
    %420 = vmatpush1.bf16.msra.mxu0 0
    %421 = vmatprep.mubr.bf16.mxu0 0
    %422 = vmatmul.mubr.bf16.gmra.mrb[0].mxu0 %v317
    %v423 = vpop.f32.mrb[0].mxu0
    %v424 = vadd.f32 %v339, %v423
    %v425 = vpop.f32.mrb[0].mxu0
    %v426 = vpop.f32.mrb[0].mxu0
    %v427 = vpop.f32.mrb[0].mxu0
    %428 = vdwg.mxu0
    %v429 = vadd.f32 %v89, %v424
    %v430 = vpack.c.bf16 %v90, %v90
    %431 = vmatprep.subr.bf16.mxu0 0
    %432 = vmatpush1.bf16.msra.mxu0 %v147
    %433 = vmatprep.subr.bf16.mxu0 0
    %434 = vmatpush1.bf16.msra.mxu0 %v148
    %435 = vmatprep.subr.bf16.mxu0 0
    %436 = vmatpush1.bf16.msra.mxu0 %v149
    %437 = vmatprep.subr.bf16.mxu0 0
    %438 = vmatpush1.bf16.msra.mxu0 %v150
    %439 = vmatprep.subr.bf16.mxu0 0
    %440 = vmatpush1.bf16.msra.mxu0 %v151
    %441 = vmatprep.subr.bf16.mxu0 0
    %442 = vmatpush1.bf16.msra.mxu0 %v152
    %443 = vmatprep.subr.bf16.mxu0 0
    %444 = vmatpush1.bf16.msra.mxu0 %v153
    %445 = vmatprep.subr.bf16.mxu0 0
    %446 = vmatpush1.bf16.msra.mxu0 %v154
    %447 = vmatprep.subr.bf16.mxu0 0
    %448 = vmatpush1.bf16.msra.mxu0 0
    %449 = vmatprep.subr.bf16.mxu0 0
    %450 = vmatpush1.bf16.msra.mxu0 0
    %451 = vmatprep.subr.bf16.mxu0 0
    %452 = vmatpush1.bf16.msra.mxu0 0
    %453 = vmatprep.subr.bf16.mxu0 0
    %454 = vmatpush1.bf16.msra.mxu0 0
    %455 = vmatprep.subr.bf16.mxu0 0
    %456 = vmatpush1.bf16.msra.mxu0 0
    %457 = vmatprep.subr.bf16.mxu0 0
    %458 = vmatpush1.bf16.msra.mxu0 0
    %459 = vmatprep.subr.bf16.mxu0 0
    %460 = vmatpush1.bf16.msra.mxu0 0
    %461 = vmatprep.subr.bf16.mxu0 0
    %462 = vmatpush1.bf16.msra.mxu0 0
    %463 = vmatprep.mubr.bf16.mxu0 0
    %464 = vmatmul.mubr.bf16.gmra.mrb[0].mxu0 %v430
    %v465 = vpop.f32.mrb[0].mxu0
    %v466 = vadd.f32 %v113, %v465
    %v467 = vpop.f32.mrb[0].mxu0
    %v468 = vpop.f32.mrb[0].mxu0
    %v469 = vpop.f32.mrb[0].mxu0
    %470 = vdwg.mxu0
    %v471 = vmax.f32 %v466, 0.0
    %v472 = vpack.c.bf16 %v471, %v471
    %473 = vmatprep.subr.bf16.mxu0 0
    %474 = vmatpush1.bf16.msra.mxu0 %v260
    %475 = vmatprep.subr.bf16.mxu0 0
    %476 = vmatpush1.bf16.msra.mxu0 %v261
    %477 = vmatprep.subr.bf16.mxu0 0
    %478 = vmatpush1.bf16.msra.mxu0 %v262
    %479 = vmatprep.subr.bf16.mxu0 0
    %480 = vmatpush1.bf16.msra.mxu0 %v263
    %481 = vmatprep.subr.bf16.mxu0 0
    %482 = vmatpush1.bf16.msra.mxu0 %v264
    %483 = vmatprep.subr.bf16.mxu0 0
    %484 = vmatpush1.bf16.msra.mxu0 %v265
    %485 = vmatprep.subr.bf16.mxu0 0
    %486 = vmatpush1.bf16.msra.mxu0 %v266
    %487 = vmatprep.subr.bf16.mxu0 0
    %488 = vmatpush1.bf16.msra.mxu0 %v267
    %489 = vmatprep.subr.bf16.mxu0 0
    %490 = vmatpush1.bf16.msra.mxu0 0
    %491 = vmatprep.subr.bf16.mxu0 0
    %492 = vmatpush1.bf16.msra.mxu0 0
    %493 = vmatprep.subr.bf16.mxu0 0
    %494 = vmatpush1.bf16.msra.mxu0 0
    %495 = vmatprep.subr.bf16.mxu0 0
    %496 = vmatpush1.bf16.msra.mxu0 0
    %497 = vmatprep.subr.bf16.mxu0 0
    %498 = vmatpush1.bf16.msra.mxu0 0
    %499 = vmatprep.subr.bf16.mxu0 0
    %500 = vmatpush1.bf16.msra.mxu0 0
    %501 = vmatprep.subr.bf16.mxu0 0
    %502 = vmatpush1.bf16.msra.mxu0 0
    %503 = vmatprep.subr.bf16.mxu0 0
    %504 = vmatpush1.bf16.msra.mxu0 0
    %505 = vmatprep.mubr.bf16.mxu0 0
    %506 = vmatmul.mubr.bf16.gmra.mrb[0].mxu0 %v472
    %v507 = vpop.f32.mrb[0].mxu0
    %v508 = vadd.f32 %v226, %v507
    %v509 = vpop.f32.mrb[0].mxu0
    %v510 = vpop.f32.mrb[0].mxu0
    %v511 = vpop.f32.mrb[0].mxu0
    %512 = vdwg.mxu0
    %v513 = vmax.f32 %v508, 0.0
    %v514 = vpack.c.bf16 %v513, %v513
    %515 = vmatprep.subr.bf16.mxu0 0
    %516 = vmatpush1.bf16.msra.mxu0 %v373
    %517 = vmatprep.subr.bf16.mxu0 0
    %518 = vmatpush1.bf16.msra.mxu0 %v374
    %519 = vmatprep.subr.bf16.mxu0 0
    %520 = vmatpush1.bf16.msra.mxu0 %v375
    %521 = vmatprep.subr.bf16.mxu0 0
    %522 = vmatpush1.bf16.msra.mxu0 %v376
    %523 = vmatprep.subr.bf16.mxu0 0
    %524 = vmatpush1.bf16.msra.mxu0 %v377
    %525 = vmatprep.subr.bf16.mxu0 0
    %526 = vmatpush1.bf16.msra.mxu0 %v378
    %527 = vmatprep.subr.bf16.mxu0 0
    %528 = vmatpush1.bf16.msra.mxu0 %v379
    %529 = vmatprep.subr.bf16.mxu0 0
    %530 = vmatpush1.bf16.msra.mxu0 %v380
    %531 = vmatprep.subr.bf16.mxu0 0
    %532 = vmatpush1.bf16.msra.mxu0 0
    %533 = vmatprep.subr.bf16.mxu0 0
    %534 = vmatpush1.bf16.msra.mxu0 0
    %535 = vmatprep.subr.bf16.mxu0 0
    %536 = vmatpush1.bf16.msra.mxu0 0
    %537 = vmatprep.subr.bf16.mxu0 0
    %538 = vmatpush1.bf16.msra.mxu0 0
    %539 = vmatprep.subr.bf16.mxu0 0
    %540 = vmatpush1.bf16.msra.mxu0 0
    %541 = vmatprep.subr.bf16.mxu0 0
    %542 = vmatpush1.bf16.msra.mxu0 0
    %543 = vmatprep.subr.bf16.mxu0 0
    %544 = vmatpush1.bf16.msra.mxu0 0
    %545 = vmatprep.subr.bf16.mxu0 0
    %546 = vmatpush1.bf16.msra.mxu0 0
    %547 = vmatprep.mubr.bf16.mxu0 0
    %548 = vmatmul.mubr.bf16.gmra.mrb[0].mxu0 %v514
    %v549 = vpop.f32.mrb[0].mxu0
    %v550 = vadd.f32 %v339, %v549
    %v551 = vpop.f32.mrb[0].mxu0
    %v552 = vpop.f32.mrb[0].mxu0
    %v553 = vpop.f32.mrb[0].mxu0
    %554 = vdwg.mxu0
    %v555 = vadd.f32 %v90, %v550
    %v556 = vpack.c.bf16 %v429, %v429
    %s557 = scalar_lea.vmem [#allocation5], 64
    %v558 = vld [vmem:[%s557] sm:$0xf]
    %v559 = vld [vmem:[%s557 + $0x4] sm:$0xf]
    %v560 = vld [vmem:[%s557 + $0x8] sm:$0xf]
    %v561 = vld [vmem:[%s557 + $0xc] sm:$0xf]
    %v562 = vld [vmem:[%s557 + $0x10] sm:$0xf]
    %v563 = vld [vmem:[%s557 + $0x14] sm:$0xf]
    %v564 = vld [vmem:[%s557 + $0x18] sm:$0xf]
    %v565 = vld [vmem:[%s557 + $0x1c] sm:$0xf]
    %v566 = vld [vmem:[%s557 + $0x20] sm:$0xf]
    %v567 = vld [vmem:[%s557 + $0x24] sm:$0xf]
    %v568 = vld [vmem:[%s557 + $0x28] sm:$0xf]
    %v569 = vld [vmem:[%s557 + $0x2c] sm:$0xf]
    %v570 = vld [vmem:[%s557 + $0x30] sm:$0xf]
    %v571 = vld [vmem:[%s557 + $0x34] sm:$0xf]
    %v572 = vld [vmem:[%s557 + $0x38] sm:$0xf]
    %v573 = vld [vmem:[%s557 + $0x3c] sm:$0xf]
    %s574 = scalar_lea.vmem %s2, 1
    %v575 = vld [vmem:[%s574] sm:$0x1]
    %v577 = vlaneseq
    %v578 = vshrl.u32 %v577, 7
    %v579 = vsub.s32 0, %v578
    %v580 = vrot.slane %v575, %v579
    %v598 = vunpack.c.l.b16 %v558
    %v599 = vunpack.c.l.b16 %v559
    %v600 = vunpack.c.l.b16 %v560
    %v601 = vunpack.c.l.b16 %v561
    %v602 = vunpack.c.l.b16 %v562
    %v603 = vunpack.c.l.b16 %v563
    %v604 = vunpack.c.l.b16 %v564
    %v605 = vunpack.c.l.b16 %v565
    %v606 = vunpack.c.l.b16 %v566
    %v607 = vunpack.c.l.b16 %v567
    %v608 = vunpack.c.l.b16 %v568
    %v609 = vunpack.c.l.b16 %v569
    %v610 = vunpack.c.l.b16 %v570
    %v611 = vunpack.c.l.b16 %v571
    %v612 = vunpack.c.l.b16 %v572
    %v613 = vunpack.c.l.b16 %v573
    %v614 = vpack.c.b16 %v599, %v598
    %v615 = vpack.c.b16 %v601, %v600
    %v616 = vpack.c.b16 %v603, %v602
    %v617 = vpack.c.b16 %v605, %v604
    %v618 = vpack.c.b16 %v607, %v606
    %v619 = vpack.c.b16 %v609, %v608
    %v620 = vpack.c.b16 %v611, %v610
    %v621 = vpack.c.b16 %v613, %v612
    %630 = vmatprep.subr.bf16.mxu0 0
    %631 = vmatpush1.bf16.msra.mxu0 %v614
    %632 = vmatprep.subr.bf16.mxu0 0
    %633 = vmatpush1.bf16.msra.mxu0 %v615
    %634 = vmatprep.subr.bf16.mxu0 0
    %635 = vmatpush1.bf16.msra.mxu0 %v616
    %636 = vmatprep.subr.bf16.mxu0 0
    %637 = vmatpush1.bf16.msra.mxu0 %v617
    %638 = vmatprep.subr.bf16.mxu0 0
    %639 = vmatpush1.bf16.msra.mxu0 %v618
    %640 = vmatprep.subr.bf16.mxu0 0
    %641 = vmatpush1.bf16.msra.mxu0 %v619
    %642 = vmatprep.subr.bf16.mxu0 0
    %643 = vmatpush1.bf16.msra.mxu0 %v620
    %644 = vmatprep.subr.bf16.mxu0 0
    %645 = vmatpush1.bf16.msra.mxu0 %v621
    %646 = vmatprep.subr.bf16.mxu0 0
    %647 = vmatpush1.bf16.msra.mxu0 0
    %648 = vmatprep.subr.bf16.mxu0 0
    %649 = vmatpush1.bf16.msra.mxu0 0
    %650 = vmatprep.subr.bf16.mxu0 0
    %651 = vmatpush1.bf16.msra.mxu0 0
    %652 = vmatprep.subr.bf16.mxu0 0
    %653 = vmatpush1.bf16.msra.mxu0 0
    %654 = vmatprep.subr.bf16.mxu0 0
    %655 = vmatpush1.bf16.msra.mxu0 0
    %656 = vmatprep.subr.bf16.mxu0 0
    %657 = vmatpush1.bf16.msra.mxu0 0
    %658 = vmatprep.subr.bf16.mxu0 0
    %659 = vmatpush1.bf16.msra.mxu0 0
    %660 = vmatprep.subr.bf16.mxu0 0
    %661 = vmatpush1.bf16.msra.mxu0 0
    %662 = vmatprep.mubr.bf16.mxu0 0
    %663 = vmatmul.mubr.bf16.gmra.mrb[0].mxu0 %v556
    %v664 = vpop.f32.mrb[0].mxu0
    %v665 = vadd.f32 %v580, %v664
    %v666 = vpop.f32.mrb[0].mxu0
    %v667 = vpop.f32.mrb[0].mxu0
    %v668 = vpop.f32.mrb[0].mxu0
    %669 = vdwg.mxu0
    %v670 = vmax.f32 %v665, 0.0
    %v671 = vpack.c.bf16 %v670, %v670
    %s672 = scalar_lea.vmem [#allocation7], 64
    %v673 = vld [vmem:[%s672] sm:$0xf]
    %v674 = vld [vmem:[%s672 + $0x4] sm:$0xf]
    %v675 = vld [vmem:[%s672 + $0x8] sm:$0xf]
    %v676 = vld [vmem:[%s672 + $0xc] sm:$0xf]
    %v677 = vld [vmem:[%s672 + $0x10] sm:$0xf]
    %v678 = vld [vmem:[%s672 + $0x14] sm:$0xf]
    %v679 = vld [vmem:[%s672 + $0x18] sm:$0xf]
    %v680 = vld [vmem:[%s672 + $0x1c] sm:$0xf]
    %v681 = vld [vmem:[%s672 + $0x20] sm:$0xf]
    %v682 = vld [vmem:[%s672 + $0x24] sm:$0xf]
    %v683 = vld [vmem:[%s672 + $0x28] sm:$0xf]
    %v684 = vld [vmem:[%s672 + $0x2c] sm:$0xf]
    %v685 = vld [vmem:[%s672 + $0x30] sm:$0xf]
    %v686 = vld [vmem:[%s672 + $0x34] sm:$0xf]
    %v687 = vld [vmem:[%s672 + $0x38] sm:$0xf]
    %v688 = vld [vmem:[%s672 + $0x3c] sm:$0xf]
    %s689 = scalar_lea.vmem %s4, 1
    %v690 = vld [vmem:[%s689] sm:$0x1]
    %v692 = vlaneseq
    %v693 = vshrl.u32 %v692, 7
    %v694 = vsub.s32 0, %v693
    %v695 = vrot.slane %v690, %v694
    %v713 = vunpack.c.l.b16 %v673
    %v714 = vunpack.c.l.b16 %v674
    %v715 = vunpack.c.l.b16 %v675
    %v716 = vunpack.c.l.b16 %v676
    %v717 = vunpack.c.l.b16 %v677
    %v718 = vunpack.c.l.b16 %v678
    %v719 = vunpack.c.l.b16 %v679
    %v720 = vunpack.c.l.b16 %v680
    %v721 = vunpack.c.l.b16 %v681
    %v722 = vunpack.c.l.b16 %v682
    %v723 = vunpack.c.l.b16 %v683
    %v724 = vunpack.c.l.b16 %v684
    %v725 = vunpack.c.l.b16 %v685
    %v726 = vunpack.c.l.b16 %v686
    %v727 = vunpack.c.l.b16 %v687
    %v728 = vunpack.c.l.b16 %v688
    %v729 = vpack.c.b16 %v714, %v713
    %v730 = vpack.c.b16 %v716, %v715
    %v731 = vpack.c.b16 %v718, %v717
    %v732 = vpack.c.b16 %v720, %v719
    %v733 = vpack.c.b16 %v722, %v721
    %v734 = vpack.c.b16 %v724, %v723
    %v735 = vpack.c.b16 %v726, %v725
    %v736 = vpack.c.b16 %v728, %v727
    %745 = vmatprep.subr.bf16.mxu0 0
    %746 = vmatpush1.bf16.msra.mxu0 %v729
    %747 = vmatprep.subr.bf16.mxu0 0
    %748 = vmatpush1.bf16.msra.mxu0 %v730
    %749 = vmatprep.subr.bf16.mxu0 0
    %750 = vmatpush1.bf16.msra.mxu0 %v731
    %751 = vmatprep.subr.bf16.mxu0 0
    %752 = vmatpush1.bf16.msra.mxu0 %v732
    %753 = vmatprep.subr.bf16.mxu0 0
    %754 = vmatpush1.bf16.msra.mxu0 %v733
    %755 = vmatprep.subr.bf16.mxu0 0
    %756 = vmatpush1.bf16.msra.mxu0 %v734
    %757 = vmatprep.subr.bf16.mxu0 0
    %758 = vmatpush1.bf16.msra.mxu0 %v735
    %759 = vmatprep.subr.bf16.mxu0 0
    %760 = vmatpush1.bf16.msra.mxu0 %v736
    %761 = vmatprep.subr.bf16.mxu0 0
    %762 = vmatpush1.bf16.msra.mxu0 0
    %763 = vmatprep.subr.bf16.mxu0 0
    %764 = vmatpush1.bf16.msra.mxu0 0
    %765 = vmatprep.subr.bf16.mxu0 0
    %766 = vmatpush1.bf16.msra.mxu0 0
    %767 = vmatprep.subr.bf16.mxu0 0
    %768 = vmatpush1.bf16.msra.mxu0 0
    %769 = vmatprep.subr.bf16.mxu0 0
    %770 = vmatpush1.bf16.msra.mxu0 0
    %771 = vmatprep.subr.bf16.mxu0 0
    %772 = vmatpush1.bf16.msra.mxu0 0
    %773 = vmatprep.subr.bf16.mxu0 0
    %774 = vmatpush1.bf16.msra.mxu0 0
    %775 = vmatprep.subr.bf16.mxu0 0
    %776 = vmatpush1.bf16.msra.mxu0 0
    %777 = vmatprep.mubr.bf16.mxu0 0
    %778 = vmatmul.mubr.bf16.gmra.mrb[0].mxu0 %v671
    %v779 = vpop.f32.mrb[0].mxu0
    %v780 = vadd.f32 %v695, %v779
    %v781 = vpop.f32.mrb[0].mxu0
    %v782 = vpop.f32.mrb[0].mxu0
    %v783 = vpop.f32.mrb[0].mxu0
    %784 = vdwg.mxu0
    %v785 = vmax.f32 %v780, 0.0
    %v786 = vpack.c.bf16 %v785, %v785
    %s787 = scalar_lea.vmem [#allocation8], 64
    %v788 = vld [vmem:[%s787] sm:$0xf]
    %v789 = vld [vmem:[%s787 + $0x4] sm:$0xf]
    %v790 = vld [vmem:[%s787 + $0x8] sm:$0xf]
    %v791 = vld [vmem:[%s787 + $0xc] sm:$0xf]
    %v792 = vld [vmem:[%s787 + $0x10] sm:$0xf]
    %v793 = vld [vmem:[%s787 + $0x14] sm:$0xf]
    %v794 = vld [vmem:[%s787 + $0x18] sm:$0xf]
    %v795 = vld [vmem:[%s787 + $0x1c] sm:$0xf]
    %v796 = vld [vmem:[%s787 + $0x20] sm:$0xf]
    %v797 = vld [vmem:[%s787 + $0x24] sm:$0xf]
    %v798 = vld [vmem:[%s787 + $0x28] sm:$0xf]
    %v799 = vld [vmem:[%s787 + $0x2c] sm:$0xf]
    %v800 = vld [vmem:[%s787 + $0x30] sm:$0xf]
    %v801 = vld [vmem:[%s787 + $0x34] sm:$0xf]
    %v802 = vld [vmem:[%s787 + $0x38] sm:$0xf]
    %v803 = vld [vmem:[%s787 + $0x3c] sm:$0xf]
    %s804 = scalar_lea.vmem %s6, 1
    %v805 = vld [vmem:[%s804] sm:$0x1]
    %v807 = vlaneseq
    %v808 = vshrl.u32 %v807, 7
    %v809 = vsub.s32 0, %v808
    %v810 = vrot.slane %v805, %v809
    %v828 = vunpack.c.l.b16 %v788
    %v829 = vunpack.c.l.b16 %v789
    %v830 = vunpack.c.l.b16 %v790
    %v831 = vunpack.c.l.b16 %v791
    %v832 = vunpack.c.l.b16 %v792
    %v833 = vunpack.c.l.b16 %v793
    %v834 = vunpack.c.l.b16 %v794
    %v835 = vunpack.c.l.b16 %v795
    %v836 = vunpack.c.l.b16 %v796
    %v837 = vunpack.c.l.b16 %v797
    %v838 = vunpack.c.l.b16 %v798
    %v839 = vunpack.c.l.b16 %v799
    %v840 = vunpack.c.l.b16 %v800
    %v841 = vunpack.c.l.b16 %v801
    %v842 = vunpack.c.l.b16 %v802
    %v843 = vunpack.c.l.b16 %v803
    %v844 = vpack.c.b16 %v829, %v828
    %v845 = vpack.c.b16 %v831, %v830
    %v846 = vpack.c.b16 %v833, %v832
    %v847 = vpack.c.b16 %v835, %v834
    %v848 = vpack.c.b16 %v837, %v836
    %v849 = vpack.c.b16 %v839, %v838
    %v850 = vpack.c.b16 %v841, %v840
    %v851 = vpack.c.b16 %v843, %v842
    %860 = vmatprep.subr.bf16.mxu0 0
    %861 = vmatpush1.bf16.msra.mxu0 %v844
    %862 = vmatprep.subr.bf16.mxu0 0
    %863 = vmatpush1.bf16.msra.mxu0 %v845
    %864 = vmatprep.subr.bf16.mxu0 0
    %865 = vmatpush1.bf16.msra.mxu0 %v846
    %866 = vmatprep.subr.bf16.mxu0 0
    %867 = vmatpush1.bf16.msra.mxu0 %v847
    %868 = vmatprep.subr.bf16.mxu0 0
    %869 = vmatpush1.bf16.msra.mxu0 %v848
    %870 = vmatprep.subr.bf16.mxu0 0
    %871 = vmatpush1.bf16.msra.mxu0 %v849
    %872 = vmatprep.subr.bf16.mxu0 0
    %873 = vmatpush1.bf16.msra.mxu0 %v850
    %874 = vmatprep.subr.bf16.mxu0 0
    %875 = vmatpush1.bf16.msra.mxu0 %v851
    %876 = vmatprep.subr.bf16.mxu0 0
    %877 = vmatpush1.bf16.msra.mxu0 0
    %878 = vmatprep.subr.bf16.mxu0 0
    %879 = vmatpush1.bf16.msra.mxu0 0
    %880 = vmatprep.subr.bf16.mxu0 0
    %881 = vmatpush1.bf16.msra.mxu0 0
    %882 = vmatprep.subr.bf16.mxu0 0
    %883 = vmatpush1.bf16.msra.mxu0 0
    %884 = vmatprep.subr.bf16.mxu0 0
    %885 = vmatpush1.bf16.msra.mxu0 0
    %886 = vmatprep.subr.bf16.mxu0 0
    %887 = vmatpush1.bf16.msra.mxu0 0
    %888 = vmatprep.subr.bf16.mxu0 0
    %889 = vmatpush1.bf16.msra.mxu0 0
    %890 = vmatprep.subr.bf16.mxu0 0
    %891 = vmatpush1.bf16.msra.mxu0 0
    %892 = vmatprep.mubr.bf16.mxu0 0
    %893 = vmatmul.mubr.bf16.gmra.mrb[0].mxu0 %v786
    %v894 = vpop.f32.mrb[0].mxu0
    %v895 = vadd.f32 %v810, %v894
    %v896 = vpop.f32.mrb[0].mxu0
    %v897 = vpop.f32.mrb[0].mxu0
    %v898 = vpop.f32.mrb[0].mxu0
    %899 = vdwg.mxu0
    %v900 = vadd.f32 %v429, %v895
    %v901 = vpack.c.bf16 %v555, %v555
    %902 = vmatprep.subr.bf16.mxu0 0
    %903 = vmatpush1.bf16.msra.mxu0 %v614
    %904 = vmatprep.subr.bf16.mxu0 0
    %905 = vmatpush1.bf16.msra.mxu0 %v615
    %906 = vmatprep.subr.bf16.mxu0 0
    %907 = vmatpush1.bf16.msra.mxu0 %v616
    %908 = vmatprep.subr.bf16.mxu0 0
    %909 = vmatpush1.bf16.msra.mxu0 %v617
    %910 = vmatprep.subr.bf16.mxu0 0
    %911 = vmatpush1.bf16.msra.mxu0 %v618
    %912 = vmatprep.subr.bf16.mxu0 0
    %913 = vmatpush1.bf16.msra.mxu0 %v619
    %914 = vmatprep.subr.bf16.mxu0 0
    %915 = vmatpush1.bf16.msra.mxu0 %v620
    %916 = vmatprep.subr.bf16.mxu0 0
    %917 = vmatpush1.bf16.msra.mxu0 %v621
    %918 = vmatprep.subr.bf16.mxu0 0
    %919 = vmatpush1.bf16.msra.mxu0 0
    %920 = vmatprep.subr.bf16.mxu0 0
    %921 = vmatpush1.bf16.msra.mxu0 0
    %922 = vmatprep.subr.bf16.mxu0 0
    %923 = vmatpush1.bf16.msra.mxu0 0
    %924 = vmatprep.subr.bf16.mxu0 0
    %925 = vmatpush1.bf16.msra.mxu0 0
    %926 = vmatprep.subr.bf16.mxu0 0
    %927 = vmatpush1.bf16.msra.mxu0 0
    %928 = vmatprep.subr.bf16.mxu0 0
    %929 = vmatpush1.bf16.msra.mxu0 0
    %930 = vmatprep.subr.bf16.mxu0 0
    %931 = vmatpush1.bf16.msra.mxu0 0
    %932 = vmatprep.subr.bf16.mxu0 0
    %933 = vmatpush1.bf16.msra.mxu0 0
    %934 = vmatprep.mubr.bf16.mxu0 0
    %935 = vmatmul.mubr.bf16.gmra.mrb[0].mxu0 %v901
    %v936 = vpop.f32.mrb[0].mxu0
    %v937 = vadd.f32 %v580, %v936
    %v938 = vpop.f32.mrb[0].mxu0
    %v939 = vpop.f32.mrb[0].mxu0
    %v940 = vpop.f32.mrb[0].mxu0
    %941 = vdwg.mxu0
    %v942 = vmax.f32 %v937, 0.0
    %v943 = vpack.c.bf16 %v942, %v942
    %944 = vmatprep.subr.bf16.mxu0 0
    %945 = vmatpush1.bf16.msra.mxu0 %v729
    %946 = vmatprep.subr.bf16.mxu0 0
    %947 = vmatpush1.bf16.msra.mxu0 %v730
    %948 = vmatprep.subr.bf16.mxu0 0
    %949 = vmatpush1.bf16.msra.mxu0 %v731
    %950 = vmatprep.subr.bf16.mxu0 0
    %951 = vmatpush1.bf16.msra.mxu0 %v732
    %952 = vmatprep.subr.bf16.mxu0 0
    %953 = vmatpush1.bf16.msra.mxu0 %v733
    %954 = vmatprep.subr.bf16.mxu0 0
    %955 = vmatpush1.bf16.msra.mxu0 %v734
    %956 = vmatprep.subr.bf16.mxu0 0
    %957 = vmatpush1.bf16.msra.mxu0 %v735
    %958 = vmatprep.subr.bf16.mxu0 0
    %959 = vmatpush1.bf16.msra.mxu0 %v736
    %960 = vmatprep.subr.bf16.mxu0 0
    %961 = vmatpush1.bf16.msra.mxu0 0
    %962 = vmatprep.subr.bf16.mxu0 0
    %963 = vmatpush1.bf16.msra.mxu0 0
    %964 = vmatprep.subr.bf16.mxu0 0
    %965 = vmatpush1.bf16.msra.mxu0 0
    %966 = vmatprep.subr.bf16.mxu0 0
    %967 = vmatpush1.bf16.msra.mxu0 0
    %968 = vmatprep.subr.bf16.mxu0 0
    %969 = vmatpush1.bf16.msra.mxu0 0
    %970 = vmatprep.subr.bf16.mxu0 0
    %971 = vmatpush1.bf16.msra.mxu0 0
    %972 = vmatprep.subr.bf16.mxu0 0
    %973 = vmatpush1.bf16.msra.mxu0 0
    %974 = vmatprep.subr.bf16.mxu0 0
    %975 = vmatpush1.bf16.msra.mxu0 0
    %976 = vmatprep.mubr.bf16.mxu0 0
    %977 = vmatmul.mubr.bf16.gmra.mrb[0].mxu0 %v943
    %v978 = vpop.f32.mrb[0].mxu0
    %v979 = vadd.f32 %v695, %v978
    %v980 = vpop.f32.mrb[0].mxu0
    %v981 = vpop.f32.mrb[0].mxu0
    %v982 = vpop.f32.mrb[0].mxu0
    %983 = vdwg.mxu0
    %v984 = vmax.f32 %v979, 0.0
    %v985 = vpack.c.bf16 %v984, %v984
    %986 = vmatprep.subr.bf16.mxu0 0
    %987 = vmatpush1.bf16.msra.mxu0 %v844
    %988 = vmatprep.subr.bf16.mxu0 0
    %989 = vmatpush1.bf16.msra.mxu0 %v845
    %990 = vmatprep.subr.bf16.mxu0 0
    %991 = vmatpush1.bf16.msra.mxu0 %v846
    %992 = vmatprep.subr.bf16.mxu0 0
    %993 = vmatpush1.bf16.msra.mxu0 %v847
    %994 = vmatprep.subr.bf16.mxu0 0
    %995 = vmatpush1.bf16.msra.mxu0 %v848
    %996 = vmatprep.subr.bf16.mxu0 0
    %997 = vmatpush1.bf16.msra.mxu0 %v849
    %998 = vmatprep.subr.bf16.mxu0 0
    %999 = vmatpush1.bf16.msra.mxu0 %v850
    %1000 = vmatprep.subr.bf16.mxu0 0
    %1001 = vmatpush1.bf16.msra.mxu0 %v851
    %1002 = vmatprep.subr.bf16.mxu0 0
    %1003 = vmatpush1.bf16.msra.mxu0 0
    %1004 = vmatprep.subr.bf16.mxu0 0
    %1005 = vmatpush1.bf16.msra.mxu0 0
    %1006 = vmatprep.subr.bf16.mxu0 0
    %1007 = vmatpush1.bf16.msra.mxu0 0
    %1008 = vmatprep.subr.bf16.mxu0 0
    %1009 = vmatpush1.bf16.msra.mxu0 0
    %1010 = vmatprep.subr.bf16.mxu0 0
    %1011 = vmatpush1.bf16.msra.mxu0 0
    %1012 = vmatprep.subr.bf16.mxu0 0
    %1013 = vmatpush1.bf16.msra.mxu0 0
    %1014 = vmatprep.subr.bf16.mxu0 0
    %1015 = vmatpush1.bf16.msra.mxu0 0
    %1016 = vmatprep.subr.bf16.mxu0 0
    %1017 = vmatpush1.bf16.msra.mxu0 0
    %1018 = vmatprep.mubr.bf16.mxu0 0
    %1019 = vmatmul.mubr.bf16.gmra.mrb[0].mxu0 %v985
    %v1020 = vpop.f32.mrb[0].mxu0
    %v1021 = vadd.f32 %v810, %v1020
    %v1022 = vpop.f32.mrb[0].mxu0
    %v1023 = vpop.f32.mrb[0].mxu0
    %v1024 = vpop.f32.mrb[0].mxu0
    %1025 = vdwg.mxu0
    %v1026 = vadd.f32 %v555, %v1021
    %v1027 = vld [vmem:[%s7] sm:$0x1]
    %v1028 = vld [vmem:[%s8] sm:$0x1]
    %v1029 = vlaneseq
    %v1030 = vand.u32 %v1029, 127
    %vm1031 = vcmp.lt.s32.totalorder %v1030, 32
    %v1032 = vsel %vm1031, %v900, 0.0
    %1033 = vadd.xlane.f32.xlu0 %v1032
    %v1034 = vpop.xlane.xlu0 %1033
    %v1035 = vmul.f32 %v1034, 0.03125
    %v1036 = vsub.f32 %v1032, %v1035
    %v1037 = vsel %vm1031, %v1036, 0.0
    %v1038 = vmul.f32 %v1037, %v1037
    %1039 = vadd.xlane.f32.xlu0 %v1038
    %v1040 = vpop.xlane.xlu0 %1039
    %v1041 = vmul.f32 %v1040, 0.03125
    %v1042 = vadd.f32 %v1041, 1e-05
    %v1043 = vrsqrt.pop %v1042
    %v1044 = vmul.f32 %v1037, %v1043
    %v1046 = vlaneseq
    %v1047 = vshrl.u32 %v1046, 7
    %v1048 = vsub.s32 0, %v1047
    %v1049 = vrot.slane %v1027, %v1048
    %v1051 = vmul.f32 %v1044, %v1049
    %v1053 = vlaneseq
    %v1054 = vshrl.u32 %v1053, 7
    %v1055 = vsub.s32 0, %v1054
    %v1056 = vrot.slane %v1028, %v1055
    %v1058 = vadd.f32 %v1051, %v1056
    %1059 = vst [vmem:[#allocation10] sm:$0xff] %v1058
    %v1060 = vsel %vm1031, %v1026, 0.0
    %1061 = vadd.xlane.f32.xlu0 %v1060
    %v1062 = vpop.xlane.xlu0 %1061
    %v1063 = vmul.f32 %v1062, 0.03125
    %v1064 = vsub.f32 %v1060, %v1063
    %v1065 = vsel %vm1031, %v1064, 0.0
    %v1066 = vmul.f32 %v1065, %v1065
    %1067 = vadd.xlane.f32.xlu0 %v1066
    %v1068 = vpop.xlane.xlu0 %1067
    %v1069 = vmul.f32 %v1068, 0.03125
    %v1070 = vadd.f32 %v1069, 1e-05
    %v1071 = vrsqrt.pop %v1070
    %v1072 = vmul.f32 %v1065, %v1071
    %v1073 = vmul.f32 %v1072, %v1049
    %v1074 = vadd.f32 %v1073, %v1056
    %1075 = vst [vmem:[#allocation10 + $0x8] sm:$0xff] %v1074
    // Predicated region
    $region54: #{tpu_custom_call.1} parent=1 // pred_check
      _
    $region55: #{tpu_custom_call.1} parent=1 // pred_check_branch
      %1077 = sbr.rel (0) target = $region57
    $region56: #{tpu_custom_call.1} parent=1 // pred_region
      %s1079 = ssub.s32 256, 256
      %1080 = vsyncadd [#allocation4], %s1079
      %s1081 = sshll.u32 [#allocation10], 4
      %s1082 = int_to_ptr.vmem [resolvable:$true] %s1081
      %1087 = dma.vmem_to_hbm [thread:$0]  %s1082, 256, %s9, [#allocation4], 128, 128, 8
    $region57: #{tpu_custom_call.1} parent=1 // pred_fallthru
      _
    // Predicated region
    $region58: #{tpu_custom_call.1} parent=1 // pred_check
      _
    $region59: #{tpu_custom_call.1} parent=1 // pred_check_branch
      %1089 = sbr.rel (0) target = $region61
    $region60: #{tpu_custom_call.1} parent=1 // pred_region
      %1090 = dma.done [#allocation4], 256
    $region61: #{tpu_custom_call.1} parent=1 // pred_fallthru
      _
    %1091 = vsyncpa [#allocation3], 1
    %1092 = vsyncpa [#allocation6], 1
    %1093 = vsyncpa [#allocation9], 1
    %1094 = vsyncpa [#allocation4], 1

</llo_original>
